<compile_context>
chip_gen: v7x
topology: tpu7x:2x2x1
jax: 0.10.0
libtpu: 0.0.40
codegen_flags: <defaults>
</compile_context>

<pallas_src>
import functools

import jax
import jax.numpy as jnp
from jax.experimental import pallas as pl
from jax.experimental.pallas import tpu as pltpu


def _round_up(x, m):
    return ((x + m - 1) // m) * m


def _convhole_fused_kernel(x_ref, w_ref, ss_ref, m_ref, o_ref, act_ref, patch_ref, *,
                           W, hole, cmax, cout, n_layers, bhw, pad):
    """Fused 4-layer dilated-conv + folded-BN + ReLU for one batch tile.

    x_ref    : (1, cmax, bhw)            input tile, channels on sublanes, flat spatial on lanes
    w_ref    : (L, cout, 9*cmax)         per-layer im2col weight matrices (transposed)
    ss_ref   : (L, cout, 2)              [:, :, 0] = BN scale, [:, :, 1] = BN shift (bias folded)
    m_ref    : (9, bhw) f32              per-tap validity masks (1.0 valid / 0.0 zero-pad)
    o_ref    : (1, cout, bhw)            output tile (lane-dense)
    act_ref  : VMEM (cmax, pad+bhw+pad)  flat activation buffer with lane halos
    patch_ref: VMEM (9*cmax, bhw)        im2col staging buffer
    """
    # Zero only the two halo strips (tiny); done every step so each megacore
    # TensorCore sees initialized halos.  (Halo values only ever meet mask==0,
    # but uninitialized VMEM could hold NaN and 0*NaN != 0.)
    act_ref[:, 0:pad] = jnp.zeros((cmax, pad), jnp.float32)
    act_ref[:, pad + bhw:] = jnp.zeros((cmax, pad), jnp.float32)

    # Load the input tile into the interior (lane offset `pad` is 128-aligned).
    act_ref[:, pad:pad + bhw] = x_ref[0].astype(jnp.float32)

    for layer in range(n_layers):
        # im2col: gather the 9 dilated taps as dense (cmax, bhw) slabs so the
        # dilated 3x3 conv becomes one MXU matmul with K = 9*cmax.
        for ky in range(3):
            for kx in range(3):
                t = ky * 3 + kx
                start = pad + (ky - 1) * hole * W + (kx - 1) * hole
                tap = act_ref[:, start:start + bhw] * m_ref[t:t + 1, :]
                patch_ref[t * cmax:(t + 1) * cmax, :] = tap.astype(patch_ref.dtype)

        # (cout, 9*cmax) @ (9*cmax, bhw) -> lane-dense (cout, bhw) f32 accumulator.
        y = jnp.dot(w_ref[layer], patch_ref[...],
                    preferred_element_type=jnp.float32)

        # Folded BatchNorm (+ conv bias) affine, then ReLU (f32 on the VPU).
        scale = ss_ref[layer, :, 0:1]            # (cout, 1) -> broadcasts over lanes
        shift = ss_ref[layer, :, 1:2]
        y = jnp.maximum(y * scale + shift, 0.0)

        if layer == n_layers - 1:
            o_ref[0] = y.astype(o_ref.dtype)     # dense, full-lane store
        else:
            # Dense writeback into the interior.  Channels >= cout keep the
            # layer-0 input (finite); their weight rows are zero-padded, so
            # they contribute nothing to later layers.
            act_ref[0:cout, pad:pad + bhw] = y


def fold_bn(conv_bias, gamma, beta, running_mean, running_var, eps=1e-5):
    scale = gamma / jnp.sqrt(running_var + eps)
    shift = beta + scale * (conv_bias - running_mean)
    return scale, shift                          # (cout,), (cout,)


def conv_hole_forward(x_nchw, params, hole, *, b_tile=None, use_bf16_matmul=False):
    """ConvHole.forward.  x_nchw: (N, C, H, W) like PyTorch; NCHW in, NCHW out."""
    N, cin, H, W = x_nchw.shape
    cout = params[0][0].shape[-1]
    cmax = _round_up(max(cin, cout), 8)          # sublane-aligned channel width
    L = len(params)

    # Batch tiling: fold b_tile images into the lane axis per grid step, but
    # keep >= 2 grid steps when possible so both v7x TensorCores get work.
    if b_tile is None:
        if N <= 2:
            b_tile = 1
        else:
            b_tile = max(d for d in range(1, N + 1) if N % d == 0 and N // d >= 2)
    assert N % b_tile == 0, (N, b_tile)
    T = N // b_tile
    bhw = b_tile * H * W
    PAD = _round_up(hole * (W + 1), 128)         # lane halo, 128-aligned interior

    mm_dtype = jnp.bfloat16 if use_bf16_matmul else jnp.float32

    # ---- Pack input: (N, cin, H, W) -> (T, cmax, b_tile*H*W), lane-dense. ----
    x = x_nchw
    if cin < cmax:
        x = jnp.pad(x, ((0, 0), (0, cmax - cin), (0, 0), (0, 0)))
    x_tiles = (x.reshape(T, b_tile, cmax, H * W)
                 .transpose(0, 2, 1, 3)
                 .reshape(T, cmax, bhw))

    # ---- Pack weights as (L, cout, 9*cmax) and fold BN into (L, cout, 2). ----
    w_list, ss_list = [], []
    for (w, b, g, be, m, v) in params:
        cin_l = w.shape[2]
        if cin_l < cmax:
            w = jnp.pad(w, ((0, 0), (0, 0), (0, cmax - cin_l), (0, 0)))
        w_list.append(w.reshape(9 * cmax, cout).T)          # (cout, 9*cmax)
        scale, shift = fold_bn(b, g, be, m, v)
        ss_list.append(jnp.stack([scale, shift], axis=-1))  # (cout, 2)
    w_all = jnp.stack(w_list, axis=0).astype(mm_dtype)      # (L, cout, 9*cmax)
    ss_all = jnp.stack(ss_list, axis=0).astype(jnp.float32)  # (L, cout, 2)

    # ---- Per-tap validity masks (shared by all layers / grid steps). ----
    pos = jnp.arange(bhw, dtype=jnp.int32)
    wi = pos % W
    hi = (pos // W) % H
    mask_rows = []
    for ky in range(3):
        for kx in range(3):
            dy = (ky - 1) * hole
            dx = (kx - 1) * hole
            ok = ((hi + dy >= 0) & (hi + dy < H) & (wi + dx >= 0) & (wi + dx < W))
            mask_rows.append(ok.astype(jnp.float32))
    masks = jnp.stack(mask_rows, axis=0)                    # (9, bhw)

    kernel = functools.partial(
        _convhole_fused_kernel, W=W, hole=hole, cmax=cmax, cout=cout,
        n_layers=L, bhw=bhw, pad=PAD)

    out = pl.pallas_call(
        kernel,
        out_shape=jax.ShapeDtypeStruct((T, cout, bhw), x_nchw.dtype),
        grid_spec=pltpu.PrefetchScalarGridSpec(
            num_scalar_prefetch=0,
            grid=(T,),
            in_specs=[
                pl.BlockSpec((1, cmax, bhw), lambda n: (n, 0, 0)),
                pl.BlockSpec((L, cout, 9 * cmax), lambda n: (0, 0, 0)),
                pl.BlockSpec((L, cout, 2), lambda n: (0, 0, 0)),
                pl.BlockSpec((9, bhw), lambda n: (0, 0)),
            ],
            out_specs=pl.BlockSpec((1, cout, bhw), lambda n: (n, 0, 0)),
            scratch_shapes=[
                pltpu.VMEM((cmax, PAD + bhw + PAD), jnp.float32),  # flat activations + halos
                pltpu.VMEM((9 * cmax, bhw), mm_dtype),             # im2col patch
            ],
        ),
        compiler_params=pltpu.CompilerParams(
            dimension_semantics=("parallel",),
            # TODO(synk): set vmem_limit_bytes when scaling shapes (16 MiB
            # default scoped VMEM on v5e, 32 MiB on v6e/v7x).
        ),
    )(x_tiles, w_all, ss_all, masks)

    # Unpack (T, cout, b_tile*H*W) -> (N, cout, H, W) in the wrapper.
    out = (out.reshape(T, cout, b_tile, H, W)
              .transpose(0, 2, 1, 3, 4)
              .reshape(N, cout, H, W))
    return out


def make_layer_params(key, cin, cout):
    kw, kb, kg, kbe, km, kv = jax.random.split(key, 6)
    w = jax.random.normal(kw, (3, 3, cin, cout), jnp.float32) * 0.1
    b = jax.random.normal(kb, (cout,), jnp.float32) * 0.05
    gamma = 1.0 + 0.1 * jax.random.normal(kg, (cout,), jnp.float32)
    beta = 0.05 * jax.random.normal(kbe, (cout,), jnp.float32)
    mean = 0.02 * jax.random.normal(km, (cout,), jnp.float32)
    var = jnp.abs(1.0 + 0.1 * jax.random.normal(kv, (cout,), jnp.float32))
    return w, b, gamma, beta, mean, var


def conv_hole_reference(x_nchw, params, hole):
    """Pure-JAX reference (lax.conv) for sanity checking the kernel."""
    x = x_nchw
    for (w, b, g, be, m, v) in params:
        w_oihw = jnp.transpose(w, (3, 2, 0, 1))
        y = jax.lax.conv_general_dilated(
            x, w_oihw,
            window_strides=(1, 1),
            padding=((hole, hole), (hole, hole)),
            rhs_dilation=(hole, hole),
            dimension_numbers=("NCHW", "OIHW", "NCHW"),
        )
        y = y + b[None, :, None, None]
        scale = g / jnp.sqrt(v + 1e-5)
        y = scale[None, :, None, None] * (y - m[None, :, None, None]) + be[None, :, None, None]
        x = jnp.maximum(y, 0.0)
    return x


if __name__ == "__main__":
    key = jax.random.PRNGKey(0)
    N, CIN, COUT, H, W = 2, 4, 8, 16, 16
    HOLE = 2  # dilation / padding

    kx_, k1, k2, k3, k4 = jax.random.split(key, 5)
    x = jax.random.normal(kx_, (N, CIN, H, W), jnp.float32)

    params = [
        make_layer_params(k1, CIN, COUT),
        make_layer_params(k2, COUT, COUT),
        make_layer_params(k3, COUT, COUT),
        make_layer_params(k4, COUT, COUT),
    ]

    fwd = jax.jit(conv_hole_forward, static_argnums=2)
    out = jax.block_until_ready(fwd(x, params, HOLE))

    ref = jax.block_until_ready(conv_hole_reference(x, params, HOLE))
    assert out.shape == (N, COUT, H, W), out.shape
    assert jnp.allclose(out, ref, atol=1e-3, rtol=1e-3), float(jnp.max(jnp.abs(out - ref)))

    print("KERNEL_OK")
</pallas_src>

<mosaic_0001>
module attributes {stable_mosaic.version = 11 : i64} {
  func.func @_convhole_fused_kernel(%arg0: i32, %arg1: memref<1x8x256xf32, #tpu.memory_space<vmem>>, %arg2: memref<4x8x72xf32, #tpu.memory_space<vmem>>, %arg3: memref<4x8x2xf32, #tpu.memory_space<vmem>>, %arg4: memref<9x256xf32, #tpu.memory_space<vmem>>, %arg5: memref<1x8x256xf32, #tpu.memory_space<vmem>>, %arg6: memref<8x512xf32, #tpu.memory_space<vmem>>, %arg7: memref<72x256xf32, #tpu.memory_space<vmem>>) attributes {dimension_semantics = [#tpu.dimension_semantics<parallel>], iteration_bounds = array<i64: 2>, scalar_prefetch = 0 : i64, scratch_operands = 2 : i64, tpu.core_type = #tpu.core_type<tc>, window_params = [{transform_indices = @transform_0, window_bounds = array<i64: 1, 8, 256>}, {pipeline_mode = #tpu.pipeline_mode<synchronous>, transform_indices = @transform_1, window_bounds = array<i64: 4, 8, 72>}, {pipeline_mode = #tpu.pipeline_mode<synchronous>, transform_indices = @transform_2, window_bounds = array<i64: 4, 8, 2>}, {pipeline_mode = #tpu.pipeline_mode<synchronous>, transform_indices = @transform_3, window_bounds = array<i64: 9, 256>}, {transform_indices = @transform_4, window_bounds = array<i64: 1, 8, 256>}]} {
    %cst = arith.constant 0.000000e+00 : f32
    %0 = vector.broadcast %cst : f32 to vector<8x128xf32>
    %c0 = arith.constant 0 : index
    %c0_0 = arith.constant 0 : index
    %1 = vector.load %arg6[%c0, %c0_0] : memref<8x512xf32, #tpu.memory_space<vmem>>, vector<8x128xf32>
    tpu.vector_store %arg6[%c0, %c0_0], %0 {strides = array<i32>} : memref<8x512xf32, #tpu.memory_space<vmem>>, vector<8x128xf32>,
    %cst_1 = arith.constant 0.000000e+00 : f32
    %2 = vector.broadcast %cst_1 : f32 to vector<8x128xf32>
    %c0_2 = arith.constant 0 : index
    %c384 = arith.constant 384 : index
    %3 = vector.load %arg6[%c0_2, %c384] : memref<8x512xf32, #tpu.memory_space<vmem>>, vector<8x128xf32>
    tpu.vector_store %arg6[%c0_2, %c384], %2 {strides = array<i32>} : memref<8x512xf32, #tpu.memory_space<vmem>>, vector<8x128xf32>,
    %c0_3 = arith.constant 0 : index
    %c0_4 = arith.constant 0 : index
    %c0_5 = arith.constant 0 : index
    %4 = vector.load %arg1[%c0_3, %c0_4, %c0_5] : memref<1x8x256xf32, #tpu.memory_space<vmem>>, vector<1x8x256xf32>
    %5 = vector.shape_cast %4 : vector<1x8x256xf32> to vector<8x256xf32>
    %c0_6 = arith.constant 0 : index
    %c128 = arith.constant 128 : index
    %6 = vector.load %arg6[%c0_6, %c128] : memref<8x512xf32, #tpu.memory_space<vmem>>, vector<8x256xf32>
    tpu.vector_store %arg6[%c0_6, %c128], %5 {strides = array<i32>} : memref<8x512xf32, #tpu.memory_space<vmem>>, vector<8x256xf32>,
    %c0_7 = arith.constant 0 : index
    %c94 = arith.constant 94 : index
    %7 = vector.load %arg6[%c0_7, %c94] : memref<8x512xf32, #tpu.memory_space<vmem>>, vector<8x256xf32>
    %c0_8 = arith.constant 0 : index
    %c0_9 = arith.constant 0 : index
    %8 = vector.load %arg4[%c0_8, %c0_9] : memref<9x256xf32, #tpu.memory_space<vmem>>, vector<1x256xf32>
    %9 = vector.broadcast %8 : vector<1x256xf32> to vector<8x256xf32>
    %10 = arith.mulf %7, %9 : vector<8x256xf32>
    %c0_10 = arith.constant 0 : index
    %c0_11 = arith.constant 0 : index
    %11 = vector.load %arg7[%c0_10, %c0_11] : memref<72x256xf32, #tpu.memory_space<vmem>>, vector<8x256xf32>
    tpu.vector_store %arg7[%c0_10, %c0_11], %10 {strides = array<i32>} : memref<72x256xf32, #tpu.memory_space<vmem>>, vector<8x256xf32>,
    %c0_12 = arith.constant 0 : index
    %c96 = arith.constant 96 : index
    %12 = vector.load %arg6[%c0_12, %c96] : memref<8x512xf32, #tpu.memory_space<vmem>>, vector<8x256xf32>
    %c1 = arith.constant 1 : index
    %c0_13 = arith.constant 0 : index
    %13 = vector.load %arg4[%c1, %c0_13] : memref<9x256xf32, #tpu.memory_space<vmem>>, vector<1x256xf32>
    %14 = vector.broadcast %13 : vector<1x256xf32> to vector<8x256xf32>
    %15 = arith.mulf %12, %14 : vector<8x256xf32>
    %c8 = arith.constant 8 : index
    %c0_14 = arith.constant 0 : index
    %16 = vector.load %arg7[%c8, %c0_14] : memref<72x256xf32, #tpu.memory_space<vmem>>, vector<8x256xf32>
    tpu.vector_store %arg7[%c8, %c0_14], %15 {strides = array<i32>} : memref<72x256xf32, #tpu.memory_space<vmem>>, vector<8x256xf32>,
    %c0_15 = arith.constant 0 : index
    %c98 = arith.constant 98 : index
    %17 = vector.load %arg6[%c0_15, %c98] : memref<8x512xf32, #tpu.memory_space<vmem>>, vector<8x256xf32>
    %c2 = arith.constant 2 : index
    %c0_16 = arith.constant 0 : index
    %18 = vector.load %arg4[%c2, %c0_16] : memref<9x256xf32, #tpu.memory_space<vmem>>, vector<1x256xf32>
    %19 = vector.broadcast %18 : vector<1x256xf32> to vector<8x256xf32>
    %20 = arith.mulf %17, %19 : vector<8x256xf32>
    %c16 = arith.constant 16 : index
    %c0_17 = arith.constant 0 : index
    %21 = vector.load %arg7[%c16, %c0_17] : memref<72x256xf32, #tpu.memory_space<vmem>>, vector<8x256xf32>
    tpu.vector_store %arg7[%c16, %c0_17], %20 {strides = array<i32>} : memref<72x256xf32, #tpu.memory_space<vmem>>, vector<8x256xf32>,
    %c0_18 = arith.constant 0 : index
    %c126 = arith.constant 126 : index
    %22 = vector.load %arg6[%c0_18, %c126] : memref<8x512xf32, #tpu.memory_space<vmem>>, vector<8x256xf32>
    %c3 = arith.constant 3 : index
    %c0_19 = arith.constant 0 : index
    %23 = vector.load %arg4[%c3, %c0_19] : memref<9x256xf32, #tpu.memory_space<vmem>>, vector<1x256xf32>
    %24 = vector.broadcast %23 : vector<1x256xf32> to vector<8x256xf32>
    %25 = arith.mulf %22, %24 : vector<8x256xf32>
    %c24 = arith.constant 24 : index
    %c0_20 = arith.constant 0 : index
    %26 = vector.load %arg7[%c24, %c0_20] : memref<72x256xf32, #tpu.memory_space<vmem>>, vector<8x256xf32>
    tpu.vector_store %arg7[%c24, %c0_20], %25 {strides = array<i32>} : memref<72x256xf32, #tpu.memory_space<vmem>>, vector<8x256xf32>,
    %c0_21 = arith.constant 0 : index
    %c128_22 = arith.constant 128 : index
    %27 = vector.load %arg6[%c0_21, %c128_22] : memref<8x512xf32, #tpu.memory_space<vmem>>, vector<8x256xf32>
    %c4 = arith.constant 4 : index
    %c0_23 = arith.constant 0 : index
    %28 = vector.load %arg4[%c4, %c0_23] : memref<9x256xf32, #tpu.memory_space<vmem>>, vector<1x256xf32>
    %29 = vector.broadcast %28 : vector<1x256xf32> to vector<8x256xf32>
    %30 = arith.mulf %27, %29 : vector<8x256xf32>
    %c32 = arith.constant 32 : index
    %c0_24 = arith.constant 0 : index
    %31 = vector.load %arg7[%c32, %c0_24] : memref<72x256xf32, #tpu.memory_space<vmem>>, vector<8x256xf32>
    tpu.vector_store %arg7[%c32, %c0_24], %30 {strides = array<i32>} : memref<72x256xf32, #tpu.memory_space<vmem>>, vector<8x256xf32>,
    %c0_25 = arith.constant 0 : index
    %c130 = arith.constant 130 : index
    %32 = vector.load %arg6[%c0_25, %c130] : memref<8x512xf32, #tpu.memory_space<vmem>>, vector<8x256xf32>
    %c5 = arith.constant 5 : index
    %c0_26 = arith.constant 0 : index
    %33 = vector.load %arg4[%c5, %c0_26] : memref<9x256xf32, #tpu.memory_space<vmem>>, vector<1x256xf32>
    %34 = vector.broadcast %33 : vector<1x256xf32> to vector<8x256xf32>
    %35 = arith.mulf %32, %34 : vector<8x256xf32>
    %c40 = arith.constant 40 : index
    %c0_27 = arith.constant 0 : index
    %36 = vector.load %arg7[%c40, %c0_27] : memref<72x256xf32, #tpu.memory_space<vmem>>, vector<8x256xf32>
    tpu.vector_store %arg7[%c40, %c0_27], %35 {strides = array<i32>} : memref<72x256xf32, #tpu.memory_space<vmem>>, vector<8x256xf32>,
    %c0_28 = arith.constant 0 : index
    %c158 = arith.constant 158 : index
    %37 = vector.load %arg6[%c0_28, %c158] : memref<8x512xf32, #tpu.memory_space<vmem>>, vector<8x256xf32>
    %c6 = arith.constant 6 : index
    %c0_29 = arith.constant 0 : index
    %38 = vector.load %arg4[%c6, %c0_29] : memref<9x256xf32, #tpu.memory_space<vmem>>, vector<1x256xf32>
    %39 = vector.broadcast %38 : vector<1x256xf32> to vector<8x256xf32>
    %40 = arith.mulf %37, %39 : vector<8x256xf32>
    %c48 = arith.constant 48 : index
    %c0_30 = arith.constant 0 : index
    %41 = vector.load %arg7[%c48, %c0_30] : memref<72x256xf32, #tpu.memory_space<vmem>>, vector<8x256xf32>
    tpu.vector_store %arg7[%c48, %c0_30], %40 {strides = array<i32>} : memref<72x256xf32, #tpu.memory_space<vmem>>, vector<8x256xf32>,
    %c0_31 = arith.constant 0 : index
    %c160 = arith.constant 160 : index
    %42 = vector.load %arg6[%c0_31, %c160] : memref<8x512xf32, #tpu.memory_space<vmem>>, vector<8x256xf32>
    %c7 = arith.constant 7 : index
    %c0_32 = arith.constant 0 : index
    %43 = vector.load %arg4[%c7, %c0_32] : memref<9x256xf32, #tpu.memory_space<vmem>>, vector<1x256xf32>
    %44 = vector.broadcast %43 : vector<1x256xf32> to vector<8x256xf32>
    %45 = arith.mulf %42, %44 : vector<8x256xf32>
    %c56 = arith.constant 56 : index
    %c0_33 = arith.constant 0 : index
    %46 = vector.load %arg7[%c56, %c0_33] : memref<72x256xf32, #tpu.memory_space<vmem>>, vector<8x256xf32>
    tpu.vector_store %arg7[%c56, %c0_33], %45 {strides = array<i32>} : memref<72x256xf32, #tpu.memory_space<vmem>>, vector<8x256xf32>,
    %c0_34 = arith.constant 0 : index
    %c162 = arith.constant 162 : index
    %47 = vector.load %arg6[%c0_34, %c162] : memref<8x512xf32, #tpu.memory_space<vmem>>, vector<8x256xf32>
    %c8_35 = arith.constant 8 : index
    %c0_36 = arith.constant 0 : index
    %48 = vector.load %arg4[%c8_35, %c0_36] : memref<9x256xf32, #tpu.memory_space<vmem>>, vector<1x256xf32>
    %49 = vector.broadcast %48 : vector<1x256xf32> to vector<8x256xf32>
    %50 = arith.mulf %47, %49 : vector<8x256xf32>
    %c64 = arith.constant 64 : index
    %c0_37 = arith.constant 0 : index
    %51 = vector.load %arg7[%c64, %c0_37] : memref<72x256xf32, #tpu.memory_space<vmem>>, vector<8x256xf32>
    tpu.vector_store %arg7[%c64, %c0_37], %50 {strides = array<i32>} : memref<72x256xf32, #tpu.memory_space<vmem>>, vector<8x256xf32>,
    %c0_38 = arith.constant 0 : index
    %c0_39 = arith.constant 0 : index
    %c0_40 = arith.constant 0 : index
    %52 = vector.load %arg2[%c0_38, %c0_39, %c0_40] : memref<4x8x72xf32, #tpu.memory_space<vmem>>, vector<1x8x72xf32>
    %53 = vector.shape_cast %52 : vector<1x8x72xf32> to vector<8x72xf32>
    %c0_41 = arith.constant 0 : index
    %c0_42 = arith.constant 0 : index
    %54 = vector.load %arg7[%c0_41, %c0_42] : memref<72x256xf32, #tpu.memory_space<vmem>>, vector<72x256xf32>
    %cst_43 = arith.constant dense<0.000000e+00> : vector<8x256xf32>
    %55 = tpu.matmul %53, %54, %cst_43 {dimension_numbers = #tpu.dot_dimension_numbers<[1], [0], [0], [1], [0, 0, 1, 1], [], []>} : vector<8x72xf32>, vector<72x256xf32>, vector<8x256xf32> -> vector<8x256xf32>
    %c0_44 = arith.constant 0 : index
    %c0_45 = arith.constant 0 : index
    %c0_46 = arith.constant 0 : index
    %56 = vector.load %arg3[%c0_44, %c0_45, %c0_46] : memref<4x8x2xf32, #tpu.memory_space<vmem>>, vector<1x8x1xf32>
    %57 = vector.shape_cast %56 : vector<1x8x1xf32> to vector<8x1xf32>
    %c0_47 = arith.constant 0 : index
    %c0_48 = arith.constant 0 : index
    %c1_49 = arith.constant 1 : index
    %58 = vector.load %arg3[%c0_47, %c0_48, %c1_49] : memref<4x8x2xf32, #tpu.memory_space<vmem>>, vector<1x8x1xf32>
    %59 = vector.shape_cast %58 : vector<1x8x1xf32> to vector<8x1xf32>
    %60 = vector.broadcast %57 : vector<8x1xf32> to vector<8x256xf32>
    %61 = arith.mulf %55, %60 : vector<8x256xf32>
    %62 = vector.broadcast %59 : vector<8x1xf32> to vector<8x256xf32>
    %63 = arith.addf %61, %62 : vector<8x256xf32>
    %cst_50 = arith.constant 0.000000e+00 : f32
    %64 = vector.broadcast %cst_50 : f32 to vector<8x256xf32>
    %65 = arith.maximumf %63, %64 : vector<8x256xf32>
    %c0_51 = arith.constant 0 : index
    %c128_52 = arith.constant 128 : index
    %66 = vector.load %arg6[%c0_51, %c128_52] : memref<8x512xf32, #tpu.memory_space<vmem>>, vector<8x256xf32>
    tpu.vector_store %arg6[%c0_51, %c128_52], %65 {strides = array<i32>} : memref<8x512xf32, #tpu.memory_space<vmem>>, vector<8x256xf32>,
    %c0_53 = arith.constant 0 : index
    %c94_54 = arith.constant 94 : index
    %67 = vector.load %arg6[%c0_53, %c94_54] : memref<8x512xf32, #tpu.memory_space<vmem>>, vector<8x256xf32>
    %c0_55 = arith.constant 0 : index
    %c0_56 = arith.constant 0 : index
    %68 = vector.load %arg4[%c0_55, %c0_56] : memref<9x256xf32, #tpu.memory_space<vmem>>, vector<1x256xf32>
    %69 = vector.broadcast %68 : vector<1x256xf32> to vector<8x256xf32>
    %70 = arith.mulf %67, %69 : vector<8x256xf32>
    %c0_57 = arith.constant 0 : index
    %c0_58 = arith.constant 0 : index
    %71 = vector.load %arg7[%c0_57, %c0_58] : memref<72x256xf32, #tpu.memory_space<vmem>>, vector<8x256xf32>
    tpu.vector_store %arg7[%c0_57, %c0_58], %70 {strides = array<i32>} : memref<72x256xf32, #tpu.memory_space<vmem>>, vector<8x256xf32>,
    %c0_59 = arith.constant 0 : index
    %c96_60 = arith.constant 96 : index
    %72 = vector.load %arg6[%c0_59, %c96_60] : memref<8x512xf32, #tpu.memory_space<vmem>>, vector<8x256xf32>
    %c1_61 = arith.constant 1 : index
    %c0_62 = arith.constant 0 : index
    %73 = vector.load %arg4[%c1_61, %c0_62] : memref<9x256xf32, #tpu.memory_space<vmem>>, vector<1x256xf32>
    %74 = vector.broadcast %73 : vector<1x256xf32> to vector<8x256xf32>
    %75 = arith.mulf %72, %74 : vector<8x256xf32>
    %c8_63 = arith.constant 8 : index
    %c0_64 = arith.constant 0 : index
    %76 = vector.load %arg7[%c8_63, %c0_64] : memref<72x256xf32, #tpu.memory_space<vmem>>, vector<8x256xf32>
    tpu.vector_store %arg7[%c8_63, %c0_64], %75 {strides = array<i32>} : memref<72x256xf32, #tpu.memory_space<vmem>>, vector<8x256xf32>,
    %c0_65 = arith.constant 0 : index
    %c98_66 = arith.constant 98 : index
    %77 = vector.load %arg6[%c0_65, %c98_66] : memref<8x512xf32, #tpu.memory_space<vmem>>, vector<8x256xf32>
    %c2_67 = arith.constant 2 : index
    %c0_68 = arith.constant 0 : index
    %78 = vector.load %arg4[%c2_67, %c0_68] : memref<9x256xf32, #tpu.memory_space<vmem>>, vector<1x256xf32>
    %79 = vector.broadcast %78 : vector<1x256xf32> to vector<8x256xf32>
    %80 = arith.mulf %77, %79 : vector<8x256xf32>
    %c16_69 = arith.constant 16 : index
    %c0_70 = arith.constant 0 : index
    %81 = vector.load %arg7[%c16_69, %c0_70] : memref<72x256xf32, #tpu.memory_space<vmem>>, vector<8x256xf32>
    tpu.vector_store %arg7[%c16_69, %c0_70], %80 {strides = array<i32>} : memref<72x256xf32, #tpu.memory_space<vmem>>, vector<8x256xf32>,
    %c0_71 = arith.constant 0 : index
    %c126_72 = arith.constant 126 : index
    %82 = vector.load %arg6[%c0_71, %c126_72] : memref<8x512xf32, #tpu.memory_space<vmem>>, vector<8x256xf32>
    %c3_73 = arith.constant 3 : index
    %c0_74 = arith.constant 0 : index
    %83 = vector.load %arg4[%c3_73, %c0_74] : memref<9x256xf32, #tpu.memory_space<vmem>>, vector<1x256xf32>
    %84 = vector.broadcast %83 : vector<1x256xf32> to vector<8x256xf32>
    %85 = arith.mulf %82, %84 : vector<8x256xf32>
    %c24_75 = arith.constant 24 : index
    %c0_76 = arith.constant 0 : index
    %86 = vector.load %arg7[%c24_75, %c0_76] : memref<72x256xf32, #tpu.memory_space<vmem>>, vector<8x256xf32>
    tpu.vector_store %arg7[%c24_75, %c0_76], %85 {strides = array<i32>} : memref<72x256xf32, #tpu.memory_space<vmem>>, vector<8x256xf32>,
    %c0_77 = arith.constant 0 : index
    %c128_78 = arith.constant 128 : index
    %87 = vector.load %arg6[%c0_77, %c128_78] : memref<8x512xf32, #tpu.memory_space<vmem>>, vector<8x256xf32>
    %c4_79 = arith.constant 4 : index
    %c0_80 = arith.constant 0 : index
    %88 = vector.load %arg4[%c4_79, %c0_80] : memref<9x256xf32, #tpu.memory_space<vmem>>, vector<1x256xf32>
    %89 = vector.broadcast %88 : vector<1x256xf32> to vector<8x256xf32>
    %90 = arith.mulf %87, %89 : vector<8x256xf32>
    %c32_81 = arith.constant 32 : index
    %c0_82 = arith.constant 0 : index
    %91 = vector.load %arg7[%c32_81, %c0_82] : memref<72x256xf32, #tpu.memory_space<vmem>>, vector<8x256xf32>
    tpu.vector_store %arg7[%c32_81, %c0_82], %90 {strides = array<i32>} : memref<72x256xf32, #tpu.memory_space<vmem>>, vector<8x256xf32>,
    %c0_83 = arith.constant 0 : index
    %c130_84 = arith.constant 130 : index
    %92 = vector.load %arg6[%c0_83, %c130_84] : memref<8x512xf32, #tpu.memory_space<vmem>>, vector<8x256xf32>
    %c5_85 = arith.constant 5 : index
    %c0_86 = arith.constant 0 : index
    %93 = vector.load %arg4[%c5_85, %c0_86] : memref<9x256xf32, #tpu.memory_space<vmem>>, vector<1x256xf32>
    %94 = vector.broadcast %93 : vector<1x256xf32> to vector<8x256xf32>
    %95 = arith.mulf %92, %94 : vector<8x256xf32>
    %c40_87 = arith.constant 40 : index
    %c0_88 = arith.constant 0 : index
    %96 = vector.load %arg7[%c40_87, %c0_88] : memref<72x256xf32, #tpu.memory_space<vmem>>, vector<8x256xf32>
    tpu.vector_store %arg7[%c40_87, %c0_88], %95 {strides = array<i32>} : memref<72x256xf32, #tpu.memory_space<vmem>>, vector<8x256xf32>,
    %c0_89 = arith.constant 0 : index
    %c158_90 = arith.constant 158 : index
    %97 = vector.load %arg6[%c0_89, %c158_90] : memref<8x512xf32, #tpu.memory_space<vmem>>, vector<8x256xf32>
    %c6_91 = arith.constant 6 : index
    %c0_92 = arith.constant 0 : index
    %98 = vector.load %arg4[%c6_91, %c0_92] : memref<9x256xf32, #tpu.memory_space<vmem>>, vector<1x256xf32>
    %99 = vector.broadcast %98 : vector<1x256xf32> to vector<8x256xf32>
    %100 = arith.mulf %97, %99 : vector<8x256xf32>
    %c48_93 = arith.constant 48 : index
    %c0_94 = arith.constant 0 : index
    %101 = vector.load %arg7[%c48_93, %c0_94] : memref<72x256xf32, #tpu.memory_space<vmem>>, vector<8x256xf32>
    tpu.vector_store %arg7[%c48_93, %c0_94], %100 {strides = array<i32>} : memref<72x256xf32, #tpu.memory_space<vmem>>, vector<8x256xf32>,
    %c0_95 = arith.constant 0 : index
    %c160_96 = arith.constant 160 : index
    %102 = vector.load %arg6[%c0_95, %c160_96] : memref<8x512xf32, #tpu.memory_space<vmem>>, vector<8x256xf32>
    %c7_97 = arith.constant 7 : index
    %c0_98 = arith.constant 0 : index
    %103 = vector.load %arg4[%c7_97, %c0_98] : memref<9x256xf32, #tpu.memory_space<vmem>>, vector<1x256xf32>
    %104 = vector.broadcast %103 : vector<1x256xf32> to vector<8x256xf32>
    %105 = arith.mulf %102, %104 : vector<8x256xf32>
    %c56_99 = arith.constant 56 : index
    %c0_100 = arith.constant 0 : index
    %106 = vector.load %arg7[%c56_99, %c0_100] : memref<72x256xf32, #tpu.memory_space<vmem>>, vector<8x256xf32>
    tpu.vector_store %arg7[%c56_99, %c0_100], %105 {strides = array<i32>} : memref<72x256xf32, #tpu.memory_space<vmem>>, vector<8x256xf32>,
    %c0_101 = arith.constant 0 : index
    %c162_102 = arith.constant 162 : index
    %107 = vector.load %arg6[%c0_101, %c162_102] : memref<8x512xf32, #tpu.memory_space<vmem>>, vector<8x256xf32>
    %c8_103 = arith.constant 8 : index
    %c0_104 = arith.constant 0 : index
    %108 = vector.load %arg4[%c8_103, %c0_104] : memref<9x256xf32, #tpu.memory_space<vmem>>, vector<1x256xf32>
    %109 = vector.broadcast %108 : vector<1x256xf32> to vector<8x256xf32>
    %110 = arith.mulf %107, %109 : vector<8x256xf32>
    %c64_105 = arith.constant 64 : index
    %c0_106 = arith.constant 0 : index
    %111 = vector.load %arg7[%c64_105, %c0_106] : memref<72x256xf32, #tpu.memory_space<vmem>>, vector<8x256xf32>
    tpu.vector_store %arg7[%c64_105, %c0_106], %110 {strides = array<i32>} : memref<72x256xf32, #tpu.memory_space<vmem>>, vector<8x256xf32>,
    %c1_107 = arith.constant 1 : index
    %c0_108 = arith.constant 0 : index
    %c0_109 = arith.constant 0 : index
    %112 = vector.load %arg2[%c1_107, %c0_108, %c0_109] : memref<4x8x72xf32, #tpu.memory_space<vmem>>, vector<1x8x72xf32>
    %113 = vector.shape_cast %112 : vector<1x8x72xf32> to vector<8x72xf32>
    %c0_110 = arith.constant 0 : index
    %c0_111 = arith.constant 0 : index
    %114 = vector.load %arg7[%c0_110, %c0_111] : memref<72x256xf32, #tpu.memory_space<vmem>>, vector<72x256xf32>
    %cst_112 = arith.constant dense<0.000000e+00> : vector<8x256xf32>
    %115 = tpu.matmul %113, %114, %cst_112 {dimension_numbers = #tpu.dot_dimension_numbers<[1], [0], [0], [1], [0, 0, 1, 1], [], []>} : vector<8x72xf32>, vector<72x256xf32>, vector<8x256xf32> -> vector<8x256xf32>
    %c1_113 = arith.constant 1 : index
    %c0_114 = arith.constant 0 : index
    %c0_115 = arith.constant 0 : index
    %116 = vector.load %arg3[%c1_113, %c0_114, %c0_115] : memref<4x8x2xf32, #tpu.memory_space<vmem>>, vector<1x8x1xf32>
    %117 = vector.shape_cast %116 : vector<1x8x1xf32> to vector<8x1xf32>
    %c1_116 = arith.constant 1 : index
    %c0_117 = arith.constant 0 : index
    %c1_118 = arith.constant 1 : index
    %118 = vector.load %arg3[%c1_116, %c0_117, %c1_118] : memref<4x8x2xf32, #tpu.memory_space<vmem>>, vector<1x8x1xf32>
    %119 = vector.shape_cast %118 : vector<1x8x1xf32> to vector<8x1xf32>
    %120 = vector.broadcast %117 : vector<8x1xf32> to vector<8x256xf32>
    %121 = arith.mulf %115, %120 : vector<8x256xf32>
    %122 = vector.broadcast %119 : vector<8x1xf32> to vector<8x256xf32>
    %123 = arith.addf %121, %122 : vector<8x256xf32>
    %cst_119 = arith.constant 0.000000e+00 : f32
    %124 = vector.broadcast %cst_119 : f32 to vector<8x256xf32>
    %125 = arith.maximumf %123, %124 : vector<8x256xf32>
    %c0_120 = arith.constant 0 : index
    %c128_121 = arith.constant 128 : index
    %126 = vector.load %arg6[%c0_120, %c128_121] : memref<8x512xf32, #tpu.memory_space<vmem>>, vector<8x256xf32>
    tpu.vector_store %arg6[%c0_120, %c128_121], %125 {strides = array<i32>} : memref<8x512xf32, #tpu.memory_space<vmem>>, vector<8x256xf32>,
    %c0_122 = arith.constant 0 : index
    %c94_123 = arith.constant 94 : index
    %127 = vector.load %arg6[%c0_122, %c94_123] : memref<8x512xf32, #tpu.memory_space<vmem>>, vector<8x256xf32>
    %c0_124 = arith.constant 0 : index
    %c0_125 = arith.constant 0 : index
    %128 = vector.load %arg4[%c0_124, %c0_125] : memref<9x256xf32, #tpu.memory_space<vmem>>, vector<1x256xf32>
    %129 = vector.broadcast %128 : vector<1x256xf32> to vector<8x256xf32>
    %130 = arith.mulf %127, %129 : vector<8x256xf32>
    %c0_126 = arith.constant 0 : index
    %c0_127 = arith.constant 0 : index
    %131 = vector.load %arg7[%c0_126, %c0_127] : memref<72x256xf32, #tpu.memory_space<vmem>>, vector<8x256xf32>
    tpu.vector_store %arg7[%c0_126, %c0_127], %130 {strides = array<i32>} : memref<72x256xf32, #tpu.memory_space<vmem>>, vector<8x256xf32>,
    %c0_128 = arith.constant 0 : index
    %c96_129 = arith.constant 96 : index
    %132 = vector.load %arg6[%c0_128, %c96_129] : memref<8x512xf32, #tpu.memory_space<vmem>>, vector<8x256xf32>
    %c1_130 = arith.constant 1 : index
    %c0_131 = arith.constant 0 : index
    %133 = vector.load %arg4[%c1_130, %c0_131] : memref<9x256xf32, #tpu.memory_space<vmem>>, vector<1x256xf32>
    %134 = vector.broadcast %133 : vector<1x256xf32> to vector<8x256xf32>
    %135 = arith.mulf %132, %134 : vector<8x256xf32>
    %c8_132 = arith.constant 8 : index
    %c0_133 = arith.constant 0 : index
    %136 = vector.load %arg7[%c8_132, %c0_133] : memref<72x256xf32, #tpu.memory_space<vmem>>, vector<8x256xf32>
    tpu.vector_store %arg7[%c8_132, %c0_133], %135 {strides = array<i32>} : memref<72x256xf32, #tpu.memory_space<vmem>>, vector<8x256xf32>,
    %c0_134 = arith.constant 0 : index
    %c98_135 = arith.constant 98 : index
    %137 = vector.load %arg6[%c0_134, %c98_135] : memref<8x512xf32, #tpu.memory_space<vmem>>, vector<8x256xf32>
    %c2_136 = arith.constant 2 : index
    %c0_137 = arith.constant 0 : index
    %138 = vector.load %arg4[%c2_136, %c0_137] : memref<9x256xf32, #tpu.memory_space<vmem>>, vector<1x256xf32>
    %139 = vector.broadcast %138 : vector<1x256xf32> to vector<8x256xf32>
    %140 = arith.mulf %137, %139 : vector<8x256xf32>
    %c16_138 = arith.constant 16 : index
    %c0_139 = arith.constant 0 : index
    %141 = vector.load %arg7[%c16_138, %c0_139] : memref<72x256xf32, #tpu.memory_space<vmem>>, vector<8x256xf32>
    tpu.vector_store %arg7[%c16_138, %c0_139], %140 {strides = array<i32>} : memref<72x256xf32, #tpu.memory_space<vmem>>, vector<8x256xf32>,
    %c0_140 = arith.constant 0 : index
    %c126_141 = arith.constant 126 : index
    %142 = vector.load %arg6[%c0_140, %c126_141] : memref<8x512xf32, #tpu.memory_space<vmem>>, vector<8x256xf32>
    %c3_142 = arith.constant 3 : index
    %c0_143 = arith.constant 0 : index
    %143 = vector.load %arg4[%c3_142, %c0_143] : memref<9x256xf32, #tpu.memory_space<vmem>>, vector<1x256xf32>
    %144 = vector.broadcast %143 : vector<1x256xf32> to vector<8x256xf32>
    %145 = arith.mulf %142, %144 : vector<8x256xf32>
    %c24_144 = arith.constant 24 : index
    %c0_145 = arith.constant 0 : index
    %146 = vector.load %arg7[%c24_144, %c0_145] : memref<72x256xf32, #tpu.memory_space<vmem>>, vector<8x256xf32>
    tpu.vector_store %arg7[%c24_144, %c0_145], %145 {strides = array<i32>} : memref<72x256xf32, #tpu.memory_space<vmem>>, vector<8x256xf32>,
    %c0_146 = arith.constant 0 : index
    %c128_147 = arith.constant 128 : index
    %147 = vector.load %arg6[%c0_146, %c128_147] : memref<8x512xf32, #tpu.memory_space<vmem>>, vector<8x256xf32>
    %c4_148 = arith.constant 4 : index
    %c0_149 = arith.constant 0 : index
    %148 = vector.load %arg4[%c4_148, %c0_149] : memref<9x256xf32, #tpu.memory_space<vmem>>, vector<1x256xf32>
    %149 = vector.broadcast %148 : vector<1x256xf32> to vector<8x256xf32>
    %150 = arith.mulf %147, %149 : vector<8x256xf32>
    %c32_150 = arith.constant 32 : index
    %c0_151 = arith.constant 0 : index
    %151 = vector.load %arg7[%c32_150, %c0_151] : memref<72x256xf32, #tpu.memory_space<vmem>>, vector<8x256xf32>
    tpu.vector_store %arg7[%c32_150, %c0_151], %150 {strides = array<i32>} : memref<72x256xf32, #tpu.memory_space<vmem>>, vector<8x256xf32>,
    %c0_152 = arith.constant 0 : index
    %c130_153 = arith.constant 130 : index
    %152 = vector.load %arg6[%c0_152, %c130_153] : memref<8x512xf32, #tpu.memory_space<vmem>>, vector<8x256xf32>
    %c5_154 = arith.constant 5 : index
    %c0_155 = arith.constant 0 : index
    %153 = vector.load %arg4[%c5_154, %c0_155] : memref<9x256xf32, #tpu.memory_space<vmem>>, vector<1x256xf32>
    %154 = vector.broadcast %153 : vector<1x256xf32> to vector<8x256xf32>
    %155 = arith.mulf %152, %154 : vector<8x256xf32>
    %c40_156 = arith.constant 40 : index
    %c0_157 = arith.constant 0 : index
    %156 = vector.load %arg7[%c40_156, %c0_157] : memref<72x256xf32, #tpu.memory_space<vmem>>, vector<8x256xf32>
    tpu.vector_store %arg7[%c40_156, %c0_157], %155 {strides = array<i32>} : memref<72x256xf32, #tpu.memory_space<vmem>>, vector<8x256xf32>,
    %c0_158 = arith.constant 0 : index
    %c158_159 = arith.constant 158 : index
    %157 = vector.load %arg6[%c0_158, %c158_159] : memref<8x512xf32, #tpu.memory_space<vmem>>, vector<8x256xf32>
    %c6_160 = arith.constant 6 : index
    %c0_161 = arith.constant 0 : index
    %158 = vector.load %arg4[%c6_160, %c0_161] : memref<9x256xf32, #tpu.memory_space<vmem>>, vector<1x256xf32>
    %159 = vector.broadcast %158 : vector<1x256xf32> to vector<8x256xf32>
    %160 = arith.mulf %157, %159 : vector<8x256xf32>
    %c48_162 = arith.constant 48 : index
    %c0_163 = arith.constant 0 : index
    %161 = vector.load %arg7[%c48_162, %c0_163] : memref<72x256xf32, #tpu.memory_space<vmem>>, vector<8x256xf32>
    tpu.vector_store %arg7[%c48_162, %c0_163], %160 {strides = array<i32>} : memref<72x256xf32, #tpu.memory_space<vmem>>, vector<8x256xf32>,
    %c0_164 = arith.constant 0 : index
    %c160_165 = arith.constant 160 : index
    %162 = vector.load %arg6[%c0_164, %c160_165] : memref<8x512xf32, #tpu.memory_space<vmem>>, vector<8x256xf32>
    %c7_166 = arith.constant 7 : index
    %c0_167 = arith.constant 0 : index
    %163 = vector.load %arg4[%c7_166, %c0_167] : memref<9x256xf32, #tpu.memory_space<vmem>>, vector<1x256xf32>
    %164 = vector.broadcast %163 : vector<1x256xf32> to vector<8x256xf32>
    %165 = arith.mulf %162, %164 : vector<8x256xf32>
    %c56_168 = arith.constant 56 : index
    %c0_169 = arith.constant 0 : index
    %166 = vector.load %arg7[%c56_168, %c0_169] : memref<72x256xf32, #tpu.memory_space<vmem>>, vector<8x256xf32>
    tpu.vector_store %arg7[%c56_168, %c0_169], %165 {strides = array<i32>} : memref<72x256xf32, #tpu.memory_space<vmem>>, vector<8x256xf32>,
    %c0_170 = arith.constant 0 : index
    %c162_171 = arith.constant 162 : index
    %167 = vector.load %arg6[%c0_170, %c162_171] : memref<8x512xf32, #tpu.memory_space<vmem>>, vector<8x256xf32>
    %c8_172 = arith.constant 8 : index
    %c0_173 = arith.constant 0 : index
    %168 = vector.load %arg4[%c8_172, %c0_173] : memref<9x256xf32, #tpu.memory_space<vmem>>, vector<1x256xf32>
    %169 = vector.broadcast %168 : vector<1x256xf32> to vector<8x256xf32>
    %170 = arith.mulf %167, %169 : vector<8x256xf32>
    %c64_174 = arith.constant 64 : index
    %c0_175 = arith.constant 0 : index
    %171 = vector.load %arg7[%c64_174, %c0_175] : memref<72x256xf32, #tpu.memory_space<vmem>>, vector<8x256xf32>
    tpu.vector_store %arg7[%c64_174, %c0_175], %170 {strides = array<i32>} : memref<72x256xf32, #tpu.memory_space<vmem>>, vector<8x256xf32>,
    %c2_176 = arith.constant 2 : index
    %c0_177 = arith.constant 0 : index
    %c0_178 = arith.constant 0 : index
    %172 = vector.load %arg2[%c2_176, %c0_177, %c0_178] : memref<4x8x72xf32, #tpu.memory_space<vmem>>, vector<1x8x72xf32>
    %173 = vector.shape_cast %172 : vector<1x8x72xf32> to vector<8x72xf32>
    %c0_179 = arith.constant 0 : index
    %c0_180 = arith.constant 0 : index
    %174 = vector.load %arg7[%c0_179, %c0_180] : memref<72x256xf32, #tpu.memory_space<vmem>>, vector<72x256xf32>
    %cst_181 = arith.constant dense<0.000000e+00> : vector<8x256xf32>
    %175 = tpu.matmul %173, %174, %cst_181 {dimension_numbers = #tpu.dot_dimension_numbers<[1], [0], [0], [1], [0, 0, 1, 1], [], []>} : vector<8x72xf32>, vector<72x256xf32>, vector<8x256xf32> -> vector<8x256xf32>
    %c2_182 = arith.constant 2 : index
    %c0_183 = arith.constant 0 : index
    %c0_184 = arith.constant 0 : index
    %176 = vector.load %arg3[%c2_182, %c0_183, %c0_184] : memref<4x8x2xf32, #tpu.memory_space<vmem>>, vector<1x8x1xf32>
    %177 = vector.shape_cast %176 : vector<1x8x1xf32> to vector<8x1xf32>
    %c2_185 = arith.constant 2 : index
    %c0_186 = arith.constant 0 : index
    %c1_187 = arith.constant 1 : index
    %178 = vector.load %arg3[%c2_185, %c0_186, %c1_187] : memref<4x8x2xf32, #tpu.memory_space<vmem>>, vector<1x8x1xf32>
    %179 = vector.shape_cast %178 : vector<1x8x1xf32> to vector<8x1xf32>
    %180 = vector.broadcast %177 : vector<8x1xf32> to vector<8x256xf32>
    %181 = arith.mulf %175, %180 : vector<8x256xf32>
    %182 = vector.broadcast %179 : vector<8x1xf32> to vector<8x256xf32>
    %183 = arith.addf %181, %182 : vector<8x256xf32>
    %cst_188 = arith.constant 0.000000e+00 : f32
    %184 = vector.broadcast %cst_188 : f32 to vector<8x256xf32>
    %185 = arith.maximumf %183, %184 : vector<8x256xf32>
    %c0_189 = arith.constant 0 : index
    %c128_190 = arith.constant 128 : index
    %186 = vector.load %arg6[%c0_189, %c128_190] : memref<8x512xf32, #tpu.memory_space<vmem>>, vector<8x256xf32>
    tpu.vector_store %arg6[%c0_189, %c128_190], %185 {strides = array<i32>} : memref<8x512xf32, #tpu.memory_space<vmem>>, vector<8x256xf32>,
    %c0_191 = arith.constant 0 : index
    %c94_192 = arith.constant 94 : index
    %187 = vector.load %arg6[%c0_191, %c94_192] : memref<8x512xf32, #tpu.memory_space<vmem>>, vector<8x256xf32>
    %c0_193 = arith.constant 0 : index
    %c0_194 = arith.constant 0 : index
    %188 = vector.load %arg4[%c0_193, %c0_194] : memref<9x256xf32, #tpu.memory_space<vmem>>, vector<1x256xf32>
    %189 = vector.broadcast %188 : vector<1x256xf32> to vector<8x256xf32>
    %190 = arith.mulf %187, %189 : vector<8x256xf32>
    %c0_195 = arith.constant 0 : index
    %c0_196 = arith.constant 0 : index
    %191 = vector.load %arg7[%c0_195, %c0_196] : memref<72x256xf32, #tpu.memory_space<vmem>>, vector<8x256xf32>
    tpu.vector_store %arg7[%c0_195, %c0_196], %190 {strides = array<i32>} : memref<72x256xf32, #tpu.memory_space<vmem>>, vector<8x256xf32>,
    %c0_197 = arith.constant 0 : index
    %c96_198 = arith.constant 96 : index
    %192 = vector.load %arg6[%c0_197, %c96_198] : memref<8x512xf32, #tpu.memory_space<vmem>>, vector<8x256xf32>
    %c1_199 = arith.constant 1 : index
    %c0_200 = arith.constant 0 : index
    %193 = vector.load %arg4[%c1_199, %c0_200] : memref<9x256xf32, #tpu.memory_space<vmem>>, vector<1x256xf32>
    %194 = vector.broadcast %193 : vector<1x256xf32> to vector<8x256xf32>
    %195 = arith.mulf %192, %194 : vector<8x256xf32>
    %c8_201 = arith.constant 8 : index
    %c0_202 = arith.constant 0 : index
    %196 = vector.load %arg7[%c8_201, %c0_202] : memref<72x256xf32, #tpu.memory_space<vmem>>, vector<8x256xf32>
    tpu.vector_store %arg7[%c8_201, %c0_202], %195 {strides = array<i32>} : memref<72x256xf32, #tpu.memory_space<vmem>>, vector<8x256xf32>,
    %c0_203 = arith.constant 0 : index
    %c98_204 = arith.constant 98 : index
    %197 = vector.load %arg6[%c0_203, %c98_204] : memref<8x512xf32, #tpu.memory_space<vmem>>, vector<8x256xf32>
    %c2_205 = arith.constant 2 : index
    %c0_206 = arith.constant 0 : index
    %198 = vector.load %arg4[%c2_205, %c0_206] : memref<9x256xf32, #tpu.memory_space<vmem>>, vector<1x256xf32>
    %199 = vector.broadcast %198 : vector<1x256xf32> to vector<8x256xf32>
    %200 = arith.mulf %197, %199 : vector<8x256xf32>
    %c16_207 = arith.constant 16 : index
    %c0_208 = arith.constant 0 : index
    %201 = vector.load %arg7[%c16_207, %c0_208] : memref<72x256xf32, #tpu.memory_space<vmem>>, vector<8x256xf32>
    tpu.vector_store %arg7[%c16_207, %c0_208], %200 {strides = array<i32>} : memref<72x256xf32, #tpu.memory_space<vmem>>, vector<8x256xf32>,
    %c0_209 = arith.constant 0 : index
    %c126_210 = arith.constant 126 : index
    %202 = vector.load %arg6[%c0_209, %c126_210] : memref<8x512xf32, #tpu.memory_space<vmem>>, vector<8x256xf32>
    %c3_211 = arith.constant 3 : index
    %c0_212 = arith.constant 0 : index
    %203 = vector.load %arg4[%c3_211, %c0_212] : memref<9x256xf32, #tpu.memory_space<vmem>>, vector<1x256xf32>
    %204 = vector.broadcast %203 : vector<1x256xf32> to vector<8x256xf32>
    %205 = arith.mulf %202, %204 : vector<8x256xf32>
    %c24_213 = arith.constant 24 : index
    %c0_214 = arith.constant 0 : index
    %206 = vector.load %arg7[%c24_213, %c0_214] : memref<72x256xf32, #tpu.memory_space<vmem>>, vector<8x256xf32>
    tpu.vector_store %arg7[%c24_213, %c0_214], %205 {strides = array<i32>} : memref<72x256xf32, #tpu.memory_space<vmem>>, vector<8x256xf32>,
    %c0_215 = arith.constant 0 : index
    %c128_216 = arith.constant 128 : index
    %207 = vector.load %arg6[%c0_215, %c128_216] : memref<8x512xf32, #tpu.memory_space<vmem>>, vector<8x256xf32>
    %c4_217 = arith.constant 4 : index
    %c0_218 = arith.constant 0 : index
    %208 = vector.load %arg4[%c4_217, %c0_218] : memref<9x256xf32, #tpu.memory_space<vmem>>, vector<1x256xf32>
    %209 = vector.broadcast %208 : vector<1x256xf32> to vector<8x256xf32>
    %210 = arith.mulf %207, %209 : vector<8x256xf32>
    %c32_219 = arith.constant 32 : index
    %c0_220 = arith.constant 0 : index
    %211 = vector.load %arg7[%c32_219, %c0_220] : memref<72x256xf32, #tpu.memory_space<vmem>>, vector<8x256xf32>
    tpu.vector_store %arg7[%c32_219, %c0_220], %210 {strides = array<i32>} : memref<72x256xf32, #tpu.memory_space<vmem>>, vector<8x256xf32>,
    %c0_221 = arith.constant 0 : index
    %c130_222 = arith.constant 130 : index
    %212 = vector.load %arg6[%c0_221, %c130_222] : memref<8x512xf32, #tpu.memory_space<vmem>>, vector<8x256xf32>
    %c5_223 = arith.constant 5 : index
    %c0_224 = arith.constant 0 : index
    %213 = vector.load %arg4[%c5_223, %c0_224] : memref<9x256xf32, #tpu.memory_space<vmem>>, vector<1x256xf32>
    %214 = vector.broadcast %213 : vector<1x256xf32> to vector<8x256xf32>
    %215 = arith.mulf %212, %214 : vector<8x256xf32>
    %c40_225 = arith.constant 40 : index
    %c0_226 = arith.constant 0 : index
    %216 = vector.load %arg7[%c40_225, %c0_226] : memref<72x256xf32, #tpu.memory_space<vmem>>, vector<8x256xf32>
    tpu.vector_store %arg7[%c40_225, %c0_226], %215 {strides = array<i32>} : memref<72x256xf32, #tpu.memory_space<vmem>>, vector<8x256xf32>,
    %c0_227 = arith.constant 0 : index
    %c158_228 = arith.constant 158 : index
    %217 = vector.load %arg6[%c0_227, %c158_228] : memref<8x512xf32, #tpu.memory_space<vmem>>, vector<8x256xf32>
    %c6_229 = arith.constant 6 : index
    %c0_230 = arith.constant 0 : index
    %218 = vector.load %arg4[%c6_229, %c0_230] : memref<9x256xf32, #tpu.memory_space<vmem>>, vector<1x256xf32>
    %219 = vector.broadcast %218 : vector<1x256xf32> to vector<8x256xf32>
    %220 = arith.mulf %217, %219 : vector<8x256xf32>
    %c48_231 = arith.constant 48 : index
    %c0_232 = arith.constant 0 : index
    %221 = vector.load %arg7[%c48_231, %c0_232] : memref<72x256xf32, #tpu.memory_space<vmem>>, vector<8x256xf32>
    tpu.vector_store %arg7[%c48_231, %c0_232], %220 {strides = array<i32>} : memref<72x256xf32, #tpu.memory_space<vmem>>, vector<8x256xf32>,
    %c0_233 = arith.constant 0 : index
    %c160_234 = arith.constant 160 : index
    %222 = vector.load %arg6[%c0_233, %c160_234] : memref<8x512xf32, #tpu.memory_space<vmem>>, vector<8x256xf32>
    %c7_235 = arith.constant 7 : index
    %c0_236 = arith.constant 0 : index
    %223 = vector.load %arg4[%c7_235, %c0_236] : memref<9x256xf32, #tpu.memory_space<vmem>>, vector<1x256xf32>
    %224 = vector.broadcast %223 : vector<1x256xf32> to vector<8x256xf32>
    %225 = arith.mulf %222, %224 : vector<8x256xf32>
    %c56_237 = arith.constant 56 : index
    %c0_238 = arith.constant 0 : index
    %226 = vector.load %arg7[%c56_237, %c0_238] : memref<72x256xf32, #tpu.memory_space<vmem>>, vector<8x256xf32>
    tpu.vector_store %arg7[%c56_237, %c0_238], %225 {strides = array<i32>} : memref<72x256xf32, #tpu.memory_space<vmem>>, vector<8x256xf32>,
    %c0_239 = arith.constant 0 : index
    %c162_240 = arith.constant 162 : index
    %227 = vector.load %arg6[%c0_239, %c162_240] : memref<8x512xf32, #tpu.memory_space<vmem>>, vector<8x256xf32>
    %c8_241 = arith.constant 8 : index
    %c0_242 = arith.constant 0 : index
    %228 = vector.load %arg4[%c8_241, %c0_242] : memref<9x256xf32, #tpu.memory_space<vmem>>, vector<1x256xf32>
    %229 = vector.broadcast %228 : vector<1x256xf32> to vector<8x256xf32>
    %230 = arith.mulf %227, %229 : vector<8x256xf32>
    %c64_243 = arith.constant 64 : index
    %c0_244 = arith.constant 0 : index
    %231 = vector.load %arg7[%c64_243, %c0_244] : memref<72x256xf32, #tpu.memory_space<vmem>>, vector<8x256xf32>
    tpu.vector_store %arg7[%c64_243, %c0_244], %230 {strides = array<i32>} : memref<72x256xf32, #tpu.memory_space<vmem>>, vector<8x256xf32>,
    %c3_245 = arith.constant 3 : index
    %c0_246 = arith.constant 0 : index
    %c0_247 = arith.constant 0 : index
    %232 = vector.load %arg2[%c3_245, %c0_246, %c0_247] : memref<4x8x72xf32, #tpu.memory_space<vmem>>, vector<1x8x72xf32>
    %233 = vector.shape_cast %232 : vector<1x8x72xf32> to vector<8x72xf32>
    %c0_248 = arith.constant 0 : index
    %c0_249 = arith.constant 0 : index
    %234 = vector.load %arg7[%c0_248, %c0_249] : memref<72x256xf32, #tpu.memory_space<vmem>>, vector<72x256xf32>
    %cst_250 = arith.constant dense<0.000000e+00> : vector<8x256xf32>
    %235 = tpu.matmul %233, %234, %cst_250 {dimension_numbers = #tpu.dot_dimension_numbers<[1], [0], [0], [1], [0, 0, 1, 1], [], []>} : vector<8x72xf32>, vector<72x256xf32>, vector<8x256xf32> -> vector<8x256xf32>
    %c3_251 = arith.constant 3 : index
    %c0_252 = arith.constant 0 : index
    %c0_253 = arith.constant 0 : index
    %236 = vector.load %arg3[%c3_251, %c0_252, %c0_253] : memref<4x8x2xf32, #tpu.memory_space<vmem>>, vector<1x8x1xf32>
    %237 = vector.shape_cast %236 : vector<1x8x1xf32> to vector<8x1xf32>
    %c3_254 = arith.constant 3 : index
    %c0_255 = arith.constant 0 : index
    %c1_256 = arith.constant 1 : index
    %238 = vector.load %arg3[%c3_254, %c0_255, %c1_256] : memref<4x8x2xf32, #tpu.memory_space<vmem>>, vector<1x8x1xf32>
    %239 = vector.shape_cast %238 : vector<1x8x1xf32> to vector<8x1xf32>
    %240 = vector.broadcast %237 : vector<8x1xf32> to vector<8x256xf32>
    %241 = arith.mulf %235, %240 : vector<8x256xf32>
    %242 = vector.broadcast %239 : vector<8x1xf32> to vector<8x256xf32>
    %243 = arith.addf %241, %242 : vector<8x256xf32>
    %cst_257 = arith.constant 0.000000e+00 : f32
    %244 = vector.broadcast %cst_257 : f32 to vector<8x256xf32>
    %245 = arith.maximumf %243, %244 : vector<8x256xf32>
    %c0_258 = arith.constant 0 : index
    %c0_259 = arith.constant 0 : index
    %c0_260 = arith.constant 0 : index
    %246 = vector.load %arg5[%c0_258, %c0_259, %c0_260] : memref<1x8x256xf32, #tpu.memory_space<vmem>>, vector<1x8x256xf32>
    %247 = vector.shape_cast %246 : vector<1x8x256xf32> to vector<8x256xf32>
    %248 = vector.shape_cast %245 : vector<8x256xf32> to vector<1x8x256xf32>
    tpu.vector_store %arg5[%c0_258, %c0_259, %c0_260], %248 {strides = array<i32>} : memref<1x8x256xf32, #tpu.memory_space<vmem>>, vector<1x8x256xf32>,
    return
  }
  func.func @transform_0(%arg0: i32) -> (i32, i32, i32) {
    %c0_i32 = arith.constant 0 : i32
    %c0_i32_0 = arith.constant 0 : i32
    %c0_i32_1 = arith.constant 0 : i32
    return %arg0, %c0_i32, %c0_i32_0 : i32, i32, i32
  }
  func.func @transform_1(%arg0: i32) -> (i32, i32, i32) {
    %c0_i32 = arith.constant 0 : i32
    %c0_i32_0 = arith.constant 0 : i32
    %c0_i32_1 = arith.constant 0 : i32
    %c0_i32_2 = arith.constant 0 : i32
    return %c0_i32, %c0_i32_0, %c0_i32_1 : i32, i32, i32
  }
  func.func @transform_2(%arg0: i32) -> (i32, i32, i32) {
    %c0_i32 = arith.constant 0 : i32
    %c0_i32_0 = arith.constant 0 : i32
    %c0_i32_1 = arith.constant 0 : i32
    %c0_i32_2 = arith.constant 0 : i32
    return %c0_i32, %c0_i32_0, %c0_i32_1 : i32, i32, i32
  }
  func.func @transform_3(%arg0: i32) -> (i32, i32) {
    %c0_i32 = arith.constant 0 : i32
    %c0_i32_0 = arith.constant 0 : i32
    %c0_i32_1 = arith.constant 0 : i32
    return %c0_i32, %c0_i32_0 : i32, i32
  }
  func.func @transform_4(%arg0: i32) -> (i32, i32, i32) {
    %c0_i32 = arith.constant 0 : i32
    %c0_i32_0 = arith.constant 0 : i32
    %c0_i32_1 = arith.constant 0 : i32
    return %arg0, %c0_i32, %c0_i32_0 : i32, i32, i32
  }
}

</mosaic_0001>

<llo_original>
// kernel: conv_hole_forward.1
$region0: #{conv_hole_forward.1}
  #allocation0 [shape = 'u32[]', space=smem, size = 0x4, offset = 0x4, fixed_abs, tag = 'smem constant byte address 0x4 - core index']
  #allocation1 [shape = 'u32[144,128]{1,0:T(1,128)}', space=vmem, size = 0x12000, scoped, tag = 'internal scratch']
  #allocation2 [shape = 'f32[8,512]{1,0:T(8,128)}', space=vmem, size = 0x4000, scoped, tag = 'scratch operand']
  #allocation3 [shape = 'f32[72,256]{1,0:T(8,128)}', space=vmem, size = 0x12000, scoped, tag = 'scratch operand']
  %s0 = inlined_call_operand.vmem [shape: f32[2,8,256], index: 0, kind: input, shape index: {}]
  %s1 = inlined_call_operand.vmem [shape: f32[4,8,72], index: 1, kind: input, shape index: {}]
  %s2 = inlined_call_operand.vmem [shape: f32[4,8,2], index: 2, kind: input, shape index: {}]
  %s3 = inlined_call_operand.vmem [shape: f32[9,256], index: 3, kind: input, shape index: {}]
  %s4 = inlined_call_operand.vmem [shape: f32[2,8,256], index: 4, kind: output, shape index: {}]
  %s5 = sld [smem:[#allocation0]]
  $region49: #{conv_hole_forward.1} parent=0
    _
  %s7 = ssub.s32 1, %s5
  %s8 = scalar_select 0, %s7, %s5
  loop: start=0, step=1, limit=4
  $region2: #{conv_hole_forward.1} parent=0 // loop_pre_header
    _
  $region3: #{conv_hole_forward.1} parent=0 // loop_header
    %s10 = sphi 0, %s14
    %p11 = scmp.ge.s32.totalorder %s10, 4
    %s20 = sphi 0, %s22
    %s23 = sphi 0, %s20
    %s24 = sphi 0, %s23
    %s40 = sphi 0, %s24
    %s44 = sphi 0, %s44
    %s46 = sphi 0, %s44
    %s47 = sphi 0, %s46
    %s61 = sphi 0, %s47
    %s65 = sphi 0, %s65
    %s67 = sphi 0, %s65
    %s68 = sphi 0, %s67
    %s82 = sphi 0, %s68
    %s86 = sphi 0, %s86
    %s88 = sphi 0, %s86
    %s89 = sphi 0, %s88
    %s103 = sphi 0, %s89
    %s109 = sphi 0, %s111
    %s112 = sphi 0, %s109
    %s113 = sphi 0, %s112
    %s129 = sphi 0, %s113
  $region4: #{conv_hole_forward.1} parent=0 // loop_header_branch
    %13 = sbr.rel (%p11) target = $region8
  $region5: #{conv_hole_forward.1} parent=0 // loop_body
    %s15 = ssub.s32 %s10, 1
    %s16 = ssub.s32 %s10, 2
    %s17 = sadd.s32 %s10, 1
    %s18 = ssub.s32 %s10, %s17
    %p19 = scmp.eq.s32.totalorder %s18, 0
    %s21 = sadd.s32 %s20, 1
    %s22 = scalar_select %p19, %s20, %s21
    %p25 = pneg %p19
    %p26 = scmp.eq.s32.totalorder %s10, 1
    %p27 = por %p25, %p26
    %p28 = scmp.ne.s32.totalorder %s20, %s23
    %p29 = scmp.eq.s32.totalorder %s10, 0
    %p30 = por %p28, %p29
    %p31 = scmp.ne.s32.totalorder %s20, %s23
    %p32 = scmp.eq.s32.totalorder %s15, 1
    %p33 = por %p31, %p32
    %p34 = scmp.ne.s32.totalorder %s23, %s24
    %p35 = scmp.eq.s32.totalorder %s15, 0
    %p36 = por %p34, %p35
    %p37 = scmp.ne.s32.totalorder %s23, %s24
    %p38 = scmp.eq.s32.totalorder %s16, 1
    %p39 = por %p37, %p38
    %p41 = scmp.ne.s32.totalorder %s24, %s40
    %p42 = scmp.eq.s32.totalorder %s16, 0
    %p43 = por %p41, %p42
    %s45 = sadd.s32 %s44, 1
    %p48 = scmp.eq.s32.totalorder %s10, 1
    %p49 = scmp.ne.s32.totalorder %s44, %s46
    %p50 = scmp.eq.s32.totalorder %s10, 0
    %p51 = por %p49, %p50
    %p52 = scmp.ne.s32.totalorder %s44, %s46
    %p53 = scmp.eq.s32.totalorder %s15, 1
    %p54 = por %p52, %p53
    %p55 = scmp.ne.s32.totalorder %s46, %s47
    %p56 = scmp.eq.s32.totalorder %s15, 0
    %p57 = por %p55, %p56
    %p58 = scmp.ne.s32.totalorder %s46, %s47
    %p59 = scmp.eq.s32.totalorder %s16, 1
    %p60 = por %p58, %p59
    %p62 = scmp.ne.s32.totalorder %s47, %s61
    %p63 = scmp.eq.s32.totalorder %s16, 0
    %p64 = por %p62, %p63
    %s66 = sadd.s32 %s65, 1
    %p69 = scmp.eq.s32.totalorder %s10, 1
    %p70 = scmp.ne.s32.totalorder %s65, %s67
    %p71 = scmp.eq.s32.totalorder %s10, 0
    %p72 = por %p70, %p71
    %p73 = scmp.ne.s32.totalorder %s65, %s67
    %p74 = scmp.eq.s32.totalorder %s15, 1
    %p75 = por %p73, %p74
    %p76 = scmp.ne.s32.totalorder %s67, %s68
    %p77 = scmp.eq.s32.totalorder %s15, 0
    %p78 = por %p76, %p77
    %p79 = scmp.ne.s32.totalorder %s67, %s68
    %p80 = scmp.eq.s32.totalorder %s16, 1
    %p81 = por %p79, %p80
    %p83 = scmp.ne.s32.totalorder %s68, %s82
    %p84 = scmp.eq.s32.totalorder %s16, 0
    %p85 = por %p83, %p84
    %s87 = sadd.s32 %s86, 1
    %p90 = scmp.eq.s32.totalorder %s10, 1
    %p91 = scmp.ne.s32.totalorder %s86, %s88
    %p92 = scmp.eq.s32.totalorder %s10, 0
    %p93 = por %p91, %p92
    %p94 = scmp.ne.s32.totalorder %s86, %s88
    %p95 = scmp.eq.s32.totalorder %s15, 1
    %p96 = por %p94, %p95
    %p97 = scmp.ne.s32.totalorder %s88, %s89
    %p98 = scmp.eq.s32.totalorder %s15, 0
    %p99 = por %p97, %p98
    %p100 = scmp.ne.s32.totalorder %s88, %s89
    %p101 = scmp.eq.s32.totalorder %s16, 1
    %p102 = por %p100, %p101
    %p104 = scmp.ne.s32.totalorder %s89, %s103
    %p105 = scmp.eq.s32.totalorder %s16, 0
    %p106 = por %p104, %p105
    %s107 = ssub.s32 %s10, %s17
    %p108 = scmp.eq.s32.totalorder %s107, 0
    %s110 = sadd.s32 %s109, 1
    %s111 = scalar_select %p108, %s109, %s110
    %p114 = pneg %p108
    %p115 = scmp.eq.s32.totalorder %s10, 1
    %p116 = por %p114, %p115
    %p117 = scmp.ne.s32.totalorder %s109, %s112
    %p118 = scmp.eq.s32.totalorder %s10, 0
    %p119 = por %p117, %p118
    %p120 = scmp.ne.s32.totalorder %s109, %s112
    %p121 = scmp.eq.s32.totalorder %s15, 1
    %p122 = por %p120, %p121
    %p123 = scmp.ne.s32.totalorder %s112, %s113
    %p124 = scmp.eq.s32.totalorder %s15, 0
    %p125 = por %p123, %p124
    %p126 = scmp.ne.s32.totalorder %s112, %s113
    %p127 = scmp.eq.s32.totalorder %s16, 1
    %p128 = por %p126, %p127
    %p130 = scmp.ne.s32.totalorder %s113, %s129
    %p131 = scmp.eq.s32.totalorder %s16, 0
    %p132 = por %p130, %p131
    %p133 = scmp.le.s32.totalorder 1, %s10
    %p134 = scmp.lt.s32.totalorder %s10, 3
    %p135 = pnand %p133, %p134
    %p136 = pneg %p135
    // Predicated region
    $region9: #{conv_hole_forward.1} parent=5 // pred_check
      _
    $region10: #{conv_hole_forward.1} parent=5 // pred_check_branch
      %138 = sbr.rel (%p135) target = $region12
    $region11: #{conv_hole_forward.1} parent=5 // pred_region
      %s139 = ssub.s32 %s10, 1
      // Predicated region
      $region13: #{conv_hole_forward.1} parent=11 // pred_check
        %p140 = pneg %p57
      $region14: #{conv_hole_forward.1} parent=11 // pred_check_branch
        %142 = sbr.rel (%p140) target = $region16
      $region15: #{conv_hole_forward.1} parent=11 // pred_region
        _
      $region16: #{conv_hole_forward.1} parent=11 // pred_fallthru
        _
      // Predicated region
      $region17: #{conv_hole_forward.1} parent=11 // pred_check
        %p143 = pneg %p78
      $region18: #{conv_hole_forward.1} parent=11 // pred_check_branch
        %145 = sbr.rel (%p143) target = $region20
      $region19: #{conv_hole_forward.1} parent=11 // pred_region
        _
      $region20: #{conv_hole_forward.1} parent=11 // pred_fallthru
        _
      // Predicated region
      $region21: #{conv_hole_forward.1} parent=11 // pred_check
        %p146 = pneg %p99
      $region22: #{conv_hole_forward.1} parent=11 // pred_check_branch
        %148 = sbr.rel (%p146) target = $region24
      $region23: #{conv_hole_forward.1} parent=11 // pred_region
        _
      $region24: #{conv_hole_forward.1} parent=11 // pred_fallthru
        _
    $region12: #{conv_hole_forward.1} parent=5 // pred_fallthru
      _
    %p149 = scmp.lt.s32.totalorder %s10, 2
    // Predicated region
    $region25: #{conv_hole_forward.1} parent=5 // pred_check
      %p150 = pneg %p149
    $region26: #{conv_hole_forward.1} parent=5 // pred_check_branch
      %152 = sbr.rel (%p150) target = $region28
    $region27: #{conv_hole_forward.1} parent=5 // pred_region
      // Predicated region
      $region29: #{conv_hole_forward.1} parent=27 // pred_check
        %p153 = pneg %p30
      $region30: #{conv_hole_forward.1} parent=27 // pred_check_branch
        %155 = sbr.rel (%p153) target = $region32
      $region31: #{conv_hole_forward.1} parent=27 // pred_region
        %p156 = scmp.lt.s32.totalorder %s10, 1
        %s157 = scalar_select %p156, %s10, 1
        %s158 = smul.addr %s157, 2
        %s159 = smul.addr %s158, 8
        %s160 = scalar_lea.vmem %s0, %s159
      $region32: #{conv_hole_forward.1} parent=27 // pred_fallthru
        _
    $region28: #{conv_hole_forward.1} parent=5 // pred_fallthru
      _
    %p161 = scmp.le.s32.totalorder 1, %s10
    %p162 = scmp.lt.s32.totalorder %s10, 3
    %p163 = pnand %p161, %p162
    %p164 = pneg %p163
    // Predicated region
    $region33: #{conv_hole_forward.1} parent=5 // pred_check
      _
    $region34: #{conv_hole_forward.1} parent=5 // pred_check_branch
      %166 = sbr.rel (%p163) target = $region36
    $region35: #{conv_hole_forward.1} parent=5 // pred_region
      %s167 = ssub.s32 %s10, 1
      %p168 = scmp.lt.s32.totalorder %s15, 1
      %s169 = scalar_select %p168, %s15, 1
      %s170 = smul.addr %s169, 2
      %s171 = smul.addr %s170, 8
      %s172 = scalar_lea.vmem %s0, %s171
      %p173 = pneg %p36
      %p174 = pneg %p33
      %p175 = pneg %p57
      %p176 = pneg %p54
      %p177 = pneg %p78
      %p178 = pneg %p75
      %p179 = pneg %p99
      %p180 = pneg %p96
      %p181 = pneg %p125
      %p182 = pneg %p122
      %p183 = scmp.lt.s32.totalorder %s15, 1
      %s184 = scalar_select %p183, %s15, 1
      %s185 = smul.addr %s184, 2
      %s186 = smul.addr %s185, 8
      %s187 = scalar_lea.vmem %s4, %s186
      %p188 = scmp.lt.s32.totalorder %s15, 1
      %s189 = scalar_select %p188, %s15, 1
      %s190 = smul.addr %s189, 2
      %s191 = smul.addr %s190, 8
      %s192 = scalar_lea.vmem %s0, %s191
      %p193 = scmp.lt.s32.totalorder %s15, 1
      %s194 = scalar_select %p193, %s15, 1
      %s195 = smul.addr %s194, 2
      %s196 = smul.addr %s195, 8
      %s197 = scalar_lea.vmem %s4, %s196
      %198 = vst [vmem:[#allocation2] sm:$0xff] 0.0
      %199 = vst [vmem:[#allocation2 + $0x18] sm:$0xff] 0.0
      %v200 = vld [vmem:[%s192] sm:$0xff]
      %v201 = vld [vmem:[%s192 + $0x8] sm:$0xff]
      %202 = vst [vmem:[#allocation2 + $0x8] sm:$0xff] %v200
      %203 = vst [vmem:[#allocation2 + $0x10] sm:$0xff] %v201
      %v204 = vld [vmem:[#allocation2] sm:$0xff]
      %v205 = vld [vmem:[#allocation2 + $0x8] sm:$0xff]
      %v206 = vld [vmem:[#allocation2 + $0x10] sm:$0xff]
      %v207 = vld [vmem:[%s3] ss:$8 sm:$0x3]
      %v209 = vlaneseq
      %v210 = vshrl.u32 %v209, 7
      %v211 = vsub.s32 0, %v210
      %v212 = vrot.slane %v207, %v211
      %v213 = vlaneseq
      %v214 = vshrl.u32 %v213, 7
      %v215 = vsub.s32 1, %v214
      %v216 = vrot.slane %v207, %v215
      %217 = vrot.lane.b32.xlu0 %v212, 94
      %v218 = vpop.permute.xlu0 %217
      %219 = vrot.lane.b32.xlu0 %v216, 94
      %v220 = vpop.permute.xlu0 %219
      %vm221 = vcmask 769024
      %v222 = vsel %vm221, %v218, %v220
      %v226 = vmul.f32 %v204, %v218
      %v227 = vmul.f32 %v205, %v222
      %v228 = vmul.f32 %v206, %v220
      %232 = vrot.lane.b32.xlu0 %v226, 34
      %v233 = vpop.permute.xlu0 %232
      %234 = vrot.lane.b32.xlu0 %v227, 34
      %v235 = vpop.permute.xlu0 %234
      %236 = vrot.lane.b32.xlu0 %v228, 34
      %v237 = vpop.permute.xlu0 %236
      %vm238 = vcmask 277504
      %v239 = vsel %vm238, %v233, %v235
      %v240 = vsel %vm238, %v235, %v237
      %243 = vst [vmem:[#allocation3] sm:$0xff] %v239
      %244 = vst [vmem:[#allocation3 + $0x8] sm:$0xff] %v240
      %v245 = vld [vmem:[#allocation2] sm:$0xff]
      %v246 = vld [vmem:[#allocation2 + $0x8] sm:$0xff]
      %v247 = vld [vmem:[#allocation2 + $0x10] sm:$0xff]
      %s248 = scalar_lea.vmem %s3, 1
      %v249 = vld [vmem:[%s248] ss:$8 sm:$0x3]
      %v251 = vlaneseq
      %v252 = vshrl.u32 %v251, 7
      %v253 = vsub.s32 0, %v252
      %v254 = vrot.slane %v249, %v253
      %v255 = vlaneseq
      %v256 = vshrl.u32 %v255, 7
      %v257 = vsub.s32 1, %v256
      %v258 = vrot.slane %v249, %v257
      %259 = vrot.lane.b32.xlu0 %v254, 96
      %v260 = vpop.permute.xlu0 %259
      %261 = vrot.lane.b32.xlu0 %v258, 96
      %v262 = vpop.permute.xlu0 %261
      %vm263 = vcmask 785408
      %v264 = vsel %vm263, %v260, %v262
      %v268 = vmul.f32 %v245, %v260
      %v269 = vmul.f32 %v246, %v264
      %v270 = vmul.f32 %v247, %v262
      %274 = vrot.lane.b32.xlu0 %v268, 32
      %v275 = vpop.permute.xlu0 %274
      %276 = vrot.lane.b32.xlu0 %v269, 32
      %v277 = vpop.permute.xlu0 %276
      %278 = vrot.lane.b32.xlu0 %v270, 32
      %v279 = vpop.permute.xlu0 %278
      %vm280 = vcmask 261120
      %v281 = vsel %vm280, %v275, %v277
      %v282 = vsel %vm280, %v277, %v279
      %285 = vst [vmem:[#allocation3 + $0x10] sm:$0xff] %v281
      %286 = vst [vmem:[#allocation3 + $0x18] sm:$0xff] %v282
      %v287 = vld [vmem:[#allocation2] sm:$0xff]
      %v288 = vld [vmem:[#allocation2 + $0x8] sm:$0xff]
      %v289 = vld [vmem:[#allocation2 + $0x10] sm:$0xff]
      %s290 = scalar_lea.vmem %s3, 2
      %v291 = vld [vmem:[%s290] ss:$8 sm:$0x3]
      %v293 = vlaneseq
      %v294 = vshrl.u32 %v293, 7
      %v295 = vsub.s32 0, %v294
      %v296 = vrot.slane %v291, %v295
      %v297 = vlaneseq
      %v298 = vshrl.u32 %v297, 7
      %v299 = vsub.s32 1, %v298
      %v300 = vrot.slane %v291, %v299
      %301 = vrot.lane.b32.xlu0 %v296, 98
      %v302 = vpop.permute.xlu0 %301
      %303 = vrot.lane.b32.xlu0 %v300, 98
      %v304 = vpop.permute.xlu0 %303
      %vm305 = vcmask 801792
      %v306 = vsel %vm305, %v302, %v304
      %v310 = vmul.f32 %v287, %v302
      %v311 = vmul.f32 %v288, %v306
      %v312 = vmul.f32 %v289, %v304
      %316 = vrot.lane.b32.xlu0 %v310, 30
      %v317 = vpop.permute.xlu0 %316
      %318 = vrot.lane.b32.xlu0 %v311, 30
      %v319 = vpop.permute.xlu0 %318
      %320 = vrot.lane.b32.xlu0 %v312, 30
      %v321 = vpop.permute.xlu0 %320
      %vm322 = vcmask 244736
      %v323 = vsel %vm322, %v317, %v319
      %v324 = vsel %vm322, %v319, %v321
      %327 = vst [vmem:[#allocation3 + $0x20] sm:$0xff] %v323
      %328 = vst [vmem:[#allocation3 + $0x28] sm:$0xff] %v324
      %v329 = vld [vmem:[#allocation2] sm:$0xff]
      %v330 = vld [vmem:[#allocation2 + $0x8] sm:$0xff]
      %v331 = vld [vmem:[#allocation2 + $0x10] sm:$0xff]
      %s332 = scalar_lea.vmem %s3, 3
      %v333 = vld [vmem:[%s332] ss:$8 sm:$0x3]
      %v335 = vlaneseq
      %v336 = vshrl.u32 %v335, 7
      %v337 = vsub.s32 0, %v336
      %v338 = vrot.slane %v333, %v337
      %v339 = vlaneseq
      %v340 = vshrl.u32 %v339, 7
      %v341 = vsub.s32 1, %v340
      %v342 = vrot.slane %v333, %v341
      %343 = vrot.lane.b32.xlu0 %v338, 126
      %v344 = vpop.permute.xlu0 %343
      %345 = vrot.lane.b32.xlu0 %v342, 126
      %v346 = vpop.permute.xlu0 %345
      %vm347 = vcmask 1031168
      %v348 = vsel %vm347, %v344, %v346
      %v352 = vmul.f32 %v329, %v344
      %v353 = vmul.f32 %v330, %v348
      %v354 = vmul.f32 %v331, %v346
      %358 = vrot.lane.b32.xlu0 %v352, 2
      %v359 = vpop.permute.xlu0 %358
      %360 = vrot.lane.b32.xlu0 %v353, 2
      %v361 = vpop.permute.xlu0 %360
      %362 = vrot.lane.b32.xlu0 %v354, 2
      %v363 = vpop.permute.xlu0 %362
      %vm364 = vcmask 15360
      %v365 = vsel %vm364, %v359, %v361
      %v366 = vsel %vm364, %v361, %v363
      %369 = vst [vmem:[#allocation3 + $0x30] sm:$0xff] %v365
      %370 = vst [vmem:[#allocation3 + $0x38] sm:$0xff] %v366
      %v371 = vld [vmem:[#allocation2 + $0x8] sm:$0xff]
      %v372 = vld [vmem:[#allocation2 + $0x10] sm:$0xff]
      %s373 = scalar_lea.vmem %s3, 4
      %v374 = vld [vmem:[%s373] ss:$8 sm:$0x3]
      %v376 = vlaneseq
      %v377 = vshrl.u32 %v376, 7
      %v378 = vsub.s32 0, %v377
      %v379 = vrot.slane %v374, %v378
      %v380 = vlaneseq
      %v381 = vshrl.u32 %v380, 7
      %v382 = vsub.s32 1, %v381
      %v383 = vrot.slane %v374, %v382
      %v386 = vmul.f32 %v371, %v379
      %v387 = vmul.f32 %v372, %v383
      %388 = vst [vmem:[#allocation3 + $0x40] sm:$0xff] %v386
      %389 = vst [vmem:[#allocation3 + $0x48] sm:$0xff] %v387
      %v390 = vld [vmem:[#allocation2 + $0x8] sm:$0xff]
      %v391 = vld [vmem:[#allocation2 + $0x10] sm:$0xff]
      %v392 = vld [vmem:[#allocation2 + $0x18] sm:$0xff]
      %s393 = scalar_lea.vmem %s3, 5
      %v394 = vld [vmem:[%s393] ss:$8 sm:$0x3]
      %v396 = vlaneseq
      %v397 = vshrl.u32 %v396, 7
      %v398 = vsub.s32 0, %v397
      %v399 = vrot.slane %v394, %v398
      %v400 = vlaneseq
      %v401 = vshrl.u32 %v400, 7
      %v402 = vsub.s32 1, %v401
      %v403 = vrot.slane %v394, %v402
      %404 = vrot.lane.b32.xlu0 %v399, 2
      %v405 = vpop.permute.xlu0 %404
      %406 = vrot.lane.b32.xlu0 %v403, 2
      %v407 = vpop.permute.xlu0 %406
      %v408 = vsel %vm364, %v405, %v407
      %v412 = vmul.f32 %v390, %v405
      %v413 = vmul.f32 %v391, %v408
      %v414 = vmul.f32 %v392, %v407
      %418 = vrot.lane.b32.xlu0 %v412, 126
      %v419 = vpop.permute.xlu0 %418
      %420 = vrot.lane.b32.xlu0 %v413, 126
      %v421 = vpop.permute.xlu0 %420
      %422 = vrot.lane.b32.xlu0 %v414, 126
      %v423 = vpop.permute.xlu0 %422
      %v424 = vsel %vm347, %v419, %v421
      %v425 = vsel %vm347, %v421, %v423
      %428 = vst [vmem:[#allocation3 + $0x50] sm:$0xff] %v424
      %429 = vst [vmem:[#allocation3 + $0x58] sm:$0xff] %v425
      %v430 = vld [vmem:[#allocation2 + $0x8] sm:$0xff]
      %v431 = vld [vmem:[#allocation2 + $0x10] sm:$0xff]
      %v432 = vld [vmem:[#allocation2 + $0x18] sm:$0xff]
      %s433 = scalar_lea.vmem %s3, 6
      %v434 = vld [vmem:[%s433] ss:$8 sm:$0x3]
      %v436 = vlaneseq
      %v437 = vshrl.u32 %v436, 7
      %v438 = vsub.s32 0, %v437
      %v439 = vrot.slane %v434, %v438
      %v440 = vlaneseq
      %v441 = vshrl.u32 %v440, 7
      %v442 = vsub.s32 1, %v441
      %v443 = vrot.slane %v434, %v442
      %444 = vrot.lane.b32.xlu0 %v439, 30
      %v445 = vpop.permute.xlu0 %444
      %446 = vrot.lane.b32.xlu0 %v443, 30
      %v447 = vpop.permute.xlu0 %446
      %v448 = vsel %vm322, %v445, %v447
      %v452 = vmul.f32 %v430, %v445
      %v453 = vmul.f32 %v431, %v448
      %v454 = vmul.f32 %v432, %v447
      %458 = vrot.lane.b32.xlu0 %v452, 98
      %v459 = vpop.permute.xlu0 %458
      %460 = vrot.lane.b32.xlu0 %v453, 98
      %v461 = vpop.permute.xlu0 %460
      %462 = vrot.lane.b32.xlu0 %v454, 98
      %v463 = vpop.permute.xlu0 %462
      %v464 = vsel %vm305, %v459, %v461
      %v465 = vsel %vm305, %v461, %v463
      %468 = vst [vmem:[#allocation3 + $0x60] sm:$0xff] %v464
      %469 = vst [vmem:[#allocation3 + $0x68] sm:$0xff] %v465
      %v470 = vld [vmem:[#allocation2 + $0x8] sm:$0xff]
      %v471 = vld [vmem:[#allocation2 + $0x10] sm:$0xff]
      %v472 = vld [vmem:[#allocation2 + $0x18] sm:$0xff]
      %s473 = scalar_lea.vmem %s3, 7
      %v474 = vld [vmem:[%s473] ss:$8 sm:$0x3]
      %v476 = vlaneseq
      %v477 = vshrl.u32 %v476, 7
      %v478 = vsub.s32 0, %v477
      %v479 = vrot.slane %v474, %v478
      %v480 = vlaneseq
      %v481 = vshrl.u32 %v480, 7
      %v482 = vsub.s32 1, %v481
      %v483 = vrot.slane %v474, %v482
      %484 = vrot.lane.b32.xlu0 %v479, 32
      %v485 = vpop.permute.xlu0 %484
      %486 = vrot.lane.b32.xlu0 %v483, 32
      %v487 = vpop.permute.xlu0 %486
      %v488 = vsel %vm280, %v485, %v487
      %v492 = vmul.f32 %v470, %v485
      %v493 = vmul.f32 %v471, %v488
      %v494 = vmul.f32 %v472, %v487
      %498 = vrot.lane.b32.xlu0 %v492, 96
      %v499 = vpop.permute.xlu0 %498
      %500 = vrot.lane.b32.xlu0 %v493, 96
      %v501 = vpop.permute.xlu0 %500
      %502 = vrot.lane.b32.xlu0 %v494, 96
      %v503 = vpop.permute.xlu0 %502
      %v504 = vsel %vm263, %v499, %v501
      %v505 = vsel %vm263, %v501, %v503
      %508 = vst [vmem:[#allocation3 + $0x70] sm:$0xff] %v504
      %509 = vst [vmem:[#allocation3 + $0x78] sm:$0xff] %v505
      %v510 = vld [vmem:[#allocation2 + $0x8] sm:$0xff]
      %v511 = vld [vmem:[#allocation2 + $0x10] sm:$0xff]
      %v512 = vld [vmem:[#allocation2 + $0x18] sm:$0xff]
      %s513 = scalar_lea.vmem %s3, 16
      %v514 = vld [vmem:[%s513] ss:$8 sm:$0x3]
      %v516 = vlaneseq
      %v517 = vshrl.u32 %v516, 7
      %v518 = vsub.s32 0, %v517
      %v519 = vrot.slane %v514, %v518
      %v520 = vlaneseq
      %v521 = vshrl.u32 %v520, 7
      %v522 = vsub.s32 1, %v521
      %v523 = vrot.slane %v514, %v522
      %524 = vrot.lane.b32.xlu0 %v519, 34
      %v525 = vpop.permute.xlu0 %524
      %526 = vrot.lane.b32.xlu0 %v523, 34
      %v527 = vpop.permute.xlu0 %526
      %v528 = vsel %vm238, %v525, %v527
      %v532 = vmul.f32 %v510, %v525
      %v533 = vmul.f32 %v511, %v528
      %v534 = vmul.f32 %v512, %v527
      %538 = vrot.lane.b32.xlu0 %v532, 94
      %v539 = vpop.permute.xlu0 %538
      %540 = vrot.lane.b32.xlu0 %v533, 94
      %v541 = vpop.permute.xlu0 %540
      %542 = vrot.lane.b32.xlu0 %v534, 94
      %v543 = vpop.permute.xlu0 %542
      %v544 = vsel %vm221, %v539, %v541
      %v545 = vsel %vm221, %v541, %v543
      %548 = vst [vmem:[#allocation3 + $0x80] sm:$0xff] %v544
      %549 = vst [vmem:[#allocation3 + $0x88] sm:$0xff] %v545
      %v550 = vld [vmem:[%s1] sm:$0xff]
      %v551 = vld [vmem:[#allocation3] sm:$0xff]
      %v552 = vld [vmem:[#allocation3 + $0x8] sm:$0xff]
      %v553 = vld [vmem:[#allocation3 + $0x10] sm:$0xff]
      %v554 = vld [vmem:[#allocation3 + $0x18] sm:$0xff]
      %v555 = vld [vmem:[#allocation3 + $0x20] sm:$0xff]
      %v556 = vld [vmem:[#allocation3 + $0x28] sm:$0xff]
      %v557 = vld [vmem:[#allocation3 + $0x30] sm:$0xff]
      %v558 = vld [vmem:[#allocation3 + $0x38] sm:$0xff]
      %v559 = vld [vmem:[#allocation3 + $0x40] sm:$0xff]
      %v560 = vld [vmem:[#allocation3 + $0x48] sm:$0xff]
      %v561 = vld [vmem:[#allocation3 + $0x50] sm:$0xff]
      %v562 = vld [vmem:[#allocation3 + $0x58] sm:$0xff]
      %v563 = vld [vmem:[#allocation3 + $0x60] sm:$0xff]
      %v564 = vld [vmem:[#allocation3 + $0x68] sm:$0xff]
      %v565 = vld [vmem:[#allocation3 + $0x70] sm:$0xff]
      %v566 = vld [vmem:[#allocation3 + $0x78] sm:$0xff]
      %v567 = vld [vmem:[#allocation3 + $0x80] sm:$0xff]
      %v568 = vld [vmem:[#allocation3 + $0x88] sm:$0xff]
      %vm569 = vcmask 588800
      %v571 = vsel %vm569, %v550, 0
      %573 = vmatprep.subr.mxu0 %v552
      %574 = vmatpush1.msra.mxu0 %v551
      %575 = vmatprep.subr.mxu0 %v554
      %576 = vmatpush1.msra.mxu0 %v553
      %577 = vmatprep.subr.mxu0 %v556
      %578 = vmatpush1.msra.mxu0 %v555
      %579 = vmatprep.subr.mxu0 %v558
      %580 = vmatpush1.msra.mxu0 %v557
      %581 = vmatprep.subr.mxu0 %v560
      %582 = vmatpush1.msra.mxu0 %v559
      %583 = vmatprep.subr.mxu0 %v562
      %584 = vmatpush1.msra.mxu0 %v561
      %585 = vmatprep.subr.mxu0 %v564
      %586 = vmatpush1.msra.mxu0 %v563
      %587 = vmatprep.subr.mxu0 %v566
      %588 = vmatpush1.msra.mxu0 %v565
      %589 = vmatprep.subr.mxu0 %v568
      %590 = vmatpush1.msra.mxu0 %v567
      %591 = vmatprep.subr.mxu0 0.0
      %592 = vmatpush1.msra.mxu0 0.0
      %593 = vmatprep.subr.mxu0 0.0
      %594 = vmatpush1.msra.mxu0 0.0
      %595 = vmatprep.subr.mxu0 0.0
      %596 = vmatpush1.msra.mxu0 0.0
      %597 = vmatprep.subr.mxu0 0.0
      %598 = vmatpush1.msra.mxu0 0.0
      %599 = vmatprep.subr.mxu0 0.0
      %600 = vmatpush1.msra.mxu0 0.0
      %601 = vmatprep.subr.mxu0 0.0
      %602 = vmatpush1.msra.mxu0 0.0
      %603 = vmatprep.subr.mxu0 0.0
      %604 = vmatpush1.msra.mxu0 0.0
      %605 = vmatprep.subr.mxu0 0.0
      %606 = vmatpush1.msra.mxu0 0.0
      %607 = vmatprep.subr.mxu0 0.0
      %608 = vmatpush1.msra.mxu0 0.0
      %609 = vmatprep.subr.mxu0 0.0
      %610 = vmatpush1.msra.mxu0 0.0
      %611 = vmatprep.subr.mxu0 0.0
      %612 = vmatpush1.msra.mxu0 0.0
      %613 = vmatprep.subr.mxu0 0.0
      %614 = vmatpush1.msra.mxu0 0.0
      %615 = vmatprep.subr.mxu0 0.0
      %616 = vmatpush1.msra.mxu0 0.0
      %617 = vmatprep.subr.mxu0 0.0
      %618 = vmatpush1.msra.mxu0 0.0
      %619 = vmatprep.subr.mxu0 0.0
      %620 = vmatpush1.msra.mxu0 0.0
      %621 = vmatprep.subr.mxu0 0.0
      %622 = vmatpush1.msra.mxu0 0.0
      %623 = vmatprep.subr.mxu0 0.0
      %624 = vmatpush1.msra.mxu0 0.0
      %625 = vmatprep.subr.mxu0 0.0
      %626 = vmatpush1.msra.mxu0 0.0
      %627 = vmatprep.subr.mxu0 0.0
      %628 = vmatpush1.msra.mxu0 0.0
      %629 = vmatprep.subr.mxu0 0.0
      %630 = vmatpush1.msra.mxu0 0.0
      %631 = vmatprep.subr.mxu0 0.0
      %632 = vmatpush1.msra.mxu0 0.0
      %633 = vmatprep.subr.mxu0 0.0
      %634 = vmatpush1.msra.mxu0 0.0
      %635 = vmatprep.subr.mxu0 0.0
      %636 = vmatpush1.msra.mxu0 0.0
      %637 = vmatprep.mubr.f32.mxu0 0.0
      %638 = vmatmul.mubr.f32.gmra.mrb[0].mxu0 %v571
      %v639 = vpop.f32.mrb[0].mxu0
      %v640 = vadd.f32 0.0, %v639
      %v641 = vpop.f32.mrb[0].mxu0
      %v642 = vadd.f32 0.0, %v641
      %643 = vdwg.mxu0
      %v644 = vld [vmem:[%s2] sm:$0xff]
      %646 = vset.pattern.permute.xlu0 0
      %647 = vperm.xlu0 %646, %v644
      %v648 = vpop.permute.xlu0 %647
      %v650 = vmul.f32 %v640, %v648
      %v651 = vmul.f32 %v642, %v648
      %652 = vset.pattern.permute.xlu0 1
      %653 = vperm.xlu0 %652, %v644
      %v654 = vpop.permute.xlu0 %653
      %v656 = vadd.f32 %v650, %v654
      %v657 = vadd.f32 %v651, %v654
      %v658 = vmax.f32 %v656, 0.0
      %v659 = vmax.f32 %v657, 0.0
      %660 = vst [vmem:[#allocation2 + $0x8] sm:$0xff] %v658
      %661 = vst [vmem:[#allocation2 + $0x10] sm:$0xff] %v659
      %v662 = vld [vmem:[#allocation2] sm:$0xff]
      %v663 = vld [vmem:[#allocation2 + $0x8] sm:$0xff]
      %v664 = vld [vmem:[#allocation2 + $0x10] sm:$0xff]
      %v665 = vld [vmem:[%s3] ss:$8 sm:$0x3]
      %v667 = vlaneseq
      %v668 = vshrl.u32 %v667, 7
      %v669 = vsub.s32 0, %v668
      %v670 = vrot.slane %v665, %v669
      %v671 = vlaneseq
      %v672 = vshrl.u32 %v671, 7
      %v673 = vsub.s32 1, %v672
      %v674 = vrot.slane %v665, %v673
      %675 = vrot.lane.b32.xlu0 %v670, 94
      %v676 = vpop.permute.xlu0 %675
      %677 = vrot.lane.b32.xlu0 %v674, 94
      %v678 = vpop.permute.xlu0 %677
      %v679 = vsel %vm221, %v676, %v678
      %v683 = vmul.f32 %v662, %v676
      %v684 = vmul.f32 %v663, %v679
      %v685 = vmul.f32 %v664, %v678
      %689 = vrot.lane.b32.xlu0 %v683, 34
      %v690 = vpop.permute.xlu0 %689
      %691 = vrot.lane.b32.xlu0 %v684, 34
      %v692 = vpop.permute.xlu0 %691
      %693 = vrot.lane.b32.xlu0 %v685, 34
      %v694 = vpop.permute.xlu0 %693
      %v695 = vsel %vm238, %v690, %v692
      %v696 = vsel %vm238, %v692, %v694
      %699 = vst [vmem:[#allocation3] sm:$0xff] %v695
      %700 = vst [vmem:[#allocation3 + $0x8] sm:$0xff] %v696
      %v701 = vld [vmem:[#allocation2] sm:$0xff]
      %v702 = vld [vmem:[#allocation2 + $0x8] sm:$0xff]
      %v703 = vld [vmem:[#allocation2 + $0x10] sm:$0xff]
      %v704 = vld [vmem:[%s248] ss:$8 sm:$0x3]
      %v706 = vlaneseq
      %v707 = vshrl.u32 %v706, 7
      %v708 = vsub.s32 0, %v707
      %v709 = vrot.slane %v704, %v708
      %v710 = vlaneseq
      %v711 = vshrl.u32 %v710, 7
      %v712 = vsub.s32 1, %v711
      %v713 = vrot.slane %v704, %v712
      %714 = vrot.lane.b32.xlu0 %v709, 96
      %v715 = vpop.permute.xlu0 %714
      %716 = vrot.lane.b32.xlu0 %v713, 96
      %v717 = vpop.permute.xlu0 %716
      %v718 = vsel %vm263, %v715, %v717
      %v722 = vmul.f32 %v701, %v715
      %v723 = vmul.f32 %v702, %v718
      %v724 = vmul.f32 %v703, %v717
      %728 = vrot.lane.b32.xlu0 %v722, 32
      %v729 = vpop.permute.xlu0 %728
      %730 = vrot.lane.b32.xlu0 %v723, 32
      %v731 = vpop.permute.xlu0 %730
      %732 = vrot.lane.b32.xlu0 %v724, 32
      %v733 = vpop.permute.xlu0 %732
      %v734 = vsel %vm280, %v729, %v731
      %v735 = vsel %vm280, %v731, %v733
      %738 = vst [vmem:[#allocation3 + $0x10] sm:$0xff] %v734
      %739 = vst [vmem:[#allocation3 + $0x18] sm:$0xff] %v735
      %v740 = vld [vmem:[#allocation2] sm:$0xff]
      %v741 = vld [vmem:[#allocation2 + $0x8] sm:$0xff]
      %v742 = vld [vmem:[#allocation2 + $0x10] sm:$0xff]
      %v743 = vld [vmem:[%s290] ss:$8 sm:$0x3]
      %v745 = vlaneseq
      %v746 = vshrl.u32 %v745, 7
      %v747 = vsub.s32 0, %v746
      %v748 = vrot.slane %v743, %v747
      %v749 = vlaneseq
      %v750 = vshrl.u32 %v749, 7
      %v751 = vsub.s32 1, %v750
      %v752 = vrot.slane %v743, %v751
      %753 = vrot.lane.b32.xlu0 %v748, 98
      %v754 = vpop.permute.xlu0 %753
      %755 = vrot.lane.b32.xlu0 %v752, 98
      %v756 = vpop.permute.xlu0 %755
      %v757 = vsel %vm305, %v754, %v756
      %v761 = vmul.f32 %v740, %v754
      %v762 = vmul.f32 %v741, %v757
      %v763 = vmul.f32 %v742, %v756
      %767 = vrot.lane.b32.xlu0 %v761, 30
      %v768 = vpop.permute.xlu0 %767
      %769 = vrot.lane.b32.xlu0 %v762, 30
      %v770 = vpop.permute.xlu0 %769
      %771 = vrot.lane.b32.xlu0 %v763, 30
      %v772 = vpop.permute.xlu0 %771
      %v773 = vsel %vm322, %v768, %v770
      %v774 = vsel %vm322, %v770, %v772
      %777 = vst [vmem:[#allocation3 + $0x20] sm:$0xff] %v773
      %778 = vst [vmem:[#allocation3 + $0x28] sm:$0xff] %v774
      %v779 = vld [vmem:[#allocation2] sm:$0xff]
      %v780 = vld [vmem:[#allocation2 + $0x8] sm:$0xff]
      %v781 = vld [vmem:[#allocation2 + $0x10] sm:$0xff]
      %v782 = vld [vmem:[%s332] ss:$8 sm:$0x3]
      %v784 = vlaneseq
      %v785 = vshrl.u32 %v784, 7
      %v786 = vsub.s32 0, %v785
      %v787 = vrot.slane %v782, %v786
      %v788 = vlaneseq
      %v789 = vshrl.u32 %v788, 7
      %v790 = vsub.s32 1, %v789
      %v791 = vrot.slane %v782, %v790
      %792 = vrot.lane.b32.xlu0 %v787, 126
      %v793 = vpop.permute.xlu0 %792
      %794 = vrot.lane.b32.xlu0 %v791, 126
      %v795 = vpop.permute.xlu0 %794
      %v796 = vsel %vm347, %v793, %v795
      %v800 = vmul.f32 %v779, %v793
      %v801 = vmul.f32 %v780, %v796
      %v802 = vmul.f32 %v781, %v795
      %806 = vrot.lane.b32.xlu0 %v800, 2
      %v807 = vpop.permute.xlu0 %806
      %808 = vrot.lane.b32.xlu0 %v801, 2
      %v809 = vpop.permute.xlu0 %808
      %810 = vrot.lane.b32.xlu0 %v802, 2
      %v811 = vpop.permute.xlu0 %810
      %v812 = vsel %vm364, %v807, %v809
      %v813 = vsel %vm364, %v809, %v811
      %816 = vst [vmem:[#allocation3 + $0x30] sm:$0xff] %v812
      %817 = vst [vmem:[#allocation3 + $0x38] sm:$0xff] %v813
      %v818 = vld [vmem:[#allocation2 + $0x8] sm:$0xff]
      %v819 = vld [vmem:[#allocation2 + $0x10] sm:$0xff]
      %v820 = vld [vmem:[%s373] ss:$8 sm:$0x3]
      %v822 = vlaneseq
      %v823 = vshrl.u32 %v822, 7
      %v824 = vsub.s32 0, %v823
      %v825 = vrot.slane %v820, %v824
      %v826 = vlaneseq
      %v827 = vshrl.u32 %v826, 7
      %v828 = vsub.s32 1, %v827
      %v829 = vrot.slane %v820, %v828
      %v832 = vmul.f32 %v818, %v825
      %v833 = vmul.f32 %v819, %v829
      %834 = vst [vmem:[#allocation3 + $0x40] sm:$0xff] %v832
      %835 = vst [vmem:[#allocation3 + $0x48] sm:$0xff] %v833
      %v836 = vld [vmem:[#allocation2 + $0x8] sm:$0xff]
      %v837 = vld [vmem:[#allocation2 + $0x10] sm:$0xff]
      %v838 = vld [vmem:[#allocation2 + $0x18] sm:$0xff]
      %v839 = vld [vmem:[%s393] ss:$8 sm:$0x3]
      %v841 = vlaneseq
      %v842 = vshrl.u32 %v841, 7
      %v843 = vsub.s32 0, %v842
      %v844 = vrot.slane %v839, %v843
      %v845 = vlaneseq
      %v846 = vshrl.u32 %v845, 7
      %v847 = vsub.s32 1, %v846
      %v848 = vrot.slane %v839, %v847
      %849 = vrot.lane.b32.xlu0 %v844, 2
      %v850 = vpop.permute.xlu0 %849
      %851 = vrot.lane.b32.xlu0 %v848, 2
      %v852 = vpop.permute.xlu0 %851
      %v853 = vsel %vm364, %v850, %v852
      %v857 = vmul.f32 %v836, %v850
      %v858 = vmul.f32 %v837, %v853
      %v859 = vmul.f32 %v838, %v852
      %863 = vrot.lane.b32.xlu0 %v857, 126
      %v864 = vpop.permute.xlu0 %863
      %865 = vrot.lane.b32.xlu0 %v858, 126
      %v866 = vpop.permute.xlu0 %865
      %867 = vrot.lane.b32.xlu0 %v859, 126
      %v868 = vpop.permute.xlu0 %867
      %v869 = vsel %vm347, %v864, %v866
      %v870 = vsel %vm347, %v866, %v868
      %873 = vst [vmem:[#allocation3 + $0x50] sm:$0xff] %v869
      %874 = vst [vmem:[#allocation3 + $0x58] sm:$0xff] %v870
      %v875 = vld [vmem:[#allocation2 + $0x8] sm:$0xff]
      %v876 = vld [vmem:[#allocation2 + $0x10] sm:$0xff]
      %v877 = vld [vmem:[#allocation2 + $0x18] sm:$0xff]
      %v878 = vld [vmem:[%s433] ss:$8 sm:$0x3]
      %v880 = vlaneseq
      %v881 = vshrl.u32 %v880, 7
      %v882 = vsub.s32 0, %v881
      %v883 = vrot.slane %v878, %v882
      %v884 = vlaneseq
      %v885 = vshrl.u32 %v884, 7
      %v886 = vsub.s32 1, %v885
      %v887 = vrot.slane %v878, %v886
      %888 = vrot.lane.b32.xlu0 %v883, 30
      %v889 = vpop.permute.xlu0 %888
      %890 = vrot.lane.b32.xlu0 %v887, 30
      %v891 = vpop.permute.xlu0 %890
      %v892 = vsel %vm322, %v889, %v891
      %v896 = vmul.f32 %v875, %v889
      %v897 = vmul.f32 %v876, %v892
      %v898 = vmul.f32 %v877, %v891
      %902 = vrot.lane.b32.xlu0 %v896, 98
      %v903 = vpop.permute.xlu0 %902
      %904 = vrot.lane.b32.xlu0 %v897, 98
      %v905 = vpop.permute.xlu0 %904
      %906 = vrot.lane.b32.xlu0 %v898, 98
      %v907 = vpop.permute.xlu0 %906
      %v908 = vsel %vm305, %v903, %v905
      %v909 = vsel %vm305, %v905, %v907
      %912 = vst [vmem:[#allocation3 + $0x60] sm:$0xff] %v908
      %913 = vst [vmem:[#allocation3 + $0x68] sm:$0xff] %v909
      %v914 = vld [vmem:[#allocation2 + $0x8] sm:$0xff]
      %v915 = vld [vmem:[#allocation2 + $0x10] sm:$0xff]
      %v916 = vld [vmem:[#allocation2 + $0x18] sm:$0xff]
      %v917 = vld [vmem:[%s473] ss:$8 sm:$0x3]
      %v919 = vlaneseq
      %v920 = vshrl.u32 %v919, 7
      %v921 = vsub.s32 0, %v920
      %v922 = vrot.slane %v917, %v921
      %v923 = vlaneseq
      %v924 = vshrl.u32 %v923, 7
      %v925 = vsub.s32 1, %v924
      %v926 = vrot.slane %v917, %v925
      %927 = vrot.lane.b32.xlu0 %v922, 32
      %v928 = vpop.permute.xlu0 %927
      %929 = vrot.lane.b32.xlu0 %v926, 32
      %v930 = vpop.permute.xlu0 %929
      %v931 = vsel %vm280, %v928, %v930
      %v935 = vmul.f32 %v914, %v928
      %v936 = vmul.f32 %v915, %v931
      %v937 = vmul.f32 %v916, %v930
      %941 = vrot.lane.b32.xlu0 %v935, 96
      %v942 = vpop.permute.xlu0 %941
      %943 = vrot.lane.b32.xlu0 %v936, 96
      %v944 = vpop.permute.xlu0 %943
      %945 = vrot.lane.b32.xlu0 %v937, 96
      %v946 = vpop.permute.xlu0 %945
      %v947 = vsel %vm263, %v942, %v944
      %v948 = vsel %vm263, %v944, %v946
      %951 = vst [vmem:[#allocation3 + $0x70] sm:$0xff] %v947
      %952 = vst [vmem:[#allocation3 + $0x78] sm:$0xff] %v948
      %v953 = vld [vmem:[#allocation2 + $0x8] sm:$0xff]
      %v954 = vld [vmem:[#allocation2 + $0x10] sm:$0xff]
      %v955 = vld [vmem:[#allocation2 + $0x18] sm:$0xff]
      %v956 = vld [vmem:[%s513] ss:$8 sm:$0x3]
      %v958 = vlaneseq
      %v959 = vshrl.u32 %v958, 7
      %v960 = vsub.s32 0, %v959
      %v961 = vrot.slane %v956, %v960
      %v962 = vlaneseq
      %v963 = vshrl.u32 %v962, 7
      %v964 = vsub.s32 1, %v963
      %v965 = vrot.slane %v956, %v964
      %966 = vrot.lane.b32.xlu0 %v961, 34
      %v967 = vpop.permute.xlu0 %966
      %968 = vrot.lane.b32.xlu0 %v965, 34
      %v969 = vpop.permute.xlu0 %968
      %v970 = vsel %vm238, %v967, %v969
      %v974 = vmul.f32 %v953, %v967
      %v975 = vmul.f32 %v954, %v970
      %v976 = vmul.f32 %v955, %v969
      %980 = vrot.lane.b32.xlu0 %v974, 94
      %v981 = vpop.permute.xlu0 %980
      %982 = vrot.lane.b32.xlu0 %v975, 94
      %v983 = vpop.permute.xlu0 %982
      %984 = vrot.lane.b32.xlu0 %v976, 94
      %v985 = vpop.permute.xlu0 %984
      %v986 = vsel %vm221, %v981, %v983
      %v987 = vsel %vm221, %v983, %v985
      %990 = vst [vmem:[#allocation3 + $0x80] sm:$0xff] %v986
      %991 = vst [vmem:[#allocation3 + $0x88] sm:$0xff] %v987
      %s992 = scalar_lea.vmem %s1, 8
      %v993 = vld [vmem:[%s992] sm:$0xff]
      %v994 = vld [vmem:[#allocation3] sm:$0xff]
      %v995 = vld [vmem:[#allocation3 + $0x8] sm:$0xff]
      %v996 = vld [vmem:[#allocation3 + $0x10] sm:$0xff]
      %v997 = vld [vmem:[#allocation3 + $0x18] sm:$0xff]
      %v998 = vld [vmem:[#allocation3 + $0x20] sm:$0xff]
      %v999 = vld [vmem:[#allocation3 + $0x28] sm:$0xff]
      %v1000 = vld [vmem:[#allocation3 + $0x30] sm:$0xff]
      %v1001 = vld [vmem:[#allocation3 + $0x38] sm:$0xff]
      %v1002 = vld [vmem:[#allocation3 + $0x40] sm:$0xff]
      %v1003 = vld [vmem:[#allocation3 + $0x48] sm:$0xff]
      %v1004 = vld [vmem:[#allocation3 + $0x50] sm:$0xff]
      %v1005 = vld [vmem:[#allocation3 + $0x58] sm:$0xff]
      %v1006 = vld [vmem:[#allocation3 + $0x60] sm:$0xff]
      %v1007 = vld [vmem:[#allocation3 + $0x68] sm:$0xff]
      %v1008 = vld [vmem:[#allocation3 + $0x70] sm:$0xff]
      %v1009 = vld [vmem:[#allocation3 + $0x78] sm:$0xff]
      %v1010 = vld [vmem:[#allocation3 + $0x80] sm:$0xff]
      %v1011 = vld [vmem:[#allocation3 + $0x88] sm:$0xff]
      %v1013 = vsel %vm569, %v993, 0
      %1015 = vmatprep.subr.mxu0 %v995
      %1016 = vmatpush1.msra.mxu0 %v994
      %1017 = vmatprep.subr.mxu0 %v997
      %1018 = vmatpush1.msra.mxu0 %v996
      %1019 = vmatprep.subr.mxu0 %v999
      %1020 = vmatpush1.msra.mxu0 %v998
      %1021 = vmatprep.subr.mxu0 %v1001
      %1022 = vmatpush1.msra.mxu0 %v1000
      %1023 = vmatprep.subr.mxu0 %v1003
      %1024 = vmatpush1.msra.mxu0 %v1002
      %1025 = vmatprep.subr.mxu0 %v1005
      %1026 = vmatpush1.msra.mxu0 %v1004
      %1027 = vmatprep.subr.mxu0 %v1007
      %1028 = vmatpush1.msra.mxu0 %v1006
      %1029 = vmatprep.subr.mxu0 %v1009
      %1030 = vmatpush1.msra.mxu0 %v1008
      %1031 = vmatprep.subr.mxu0 %v1011
      %1032 = vmatpush1.msra.mxu0 %v1010
      %1033 = vmatprep.subr.mxu0 0.0
      %1034 = vmatpush1.msra.mxu0 0.0
      %1035 = vmatprep.subr.mxu0 0.0
      %1036 = vmatpush1.msra.mxu0 0.0
      %1037 = vmatprep.subr.mxu0 0.0
      %1038 = vmatpush1.msra.mxu0 0.0
      %1039 = vmatprep.subr.mxu0 0.0
      %1040 = vmatpush1.msra.mxu0 0.0
      %1041 = vmatprep.subr.mxu0 0.0
      %1042 = vmatpush1.msra.mxu0 0.0
      %1043 = vmatprep.subr.mxu0 0.0
      %1044 = vmatpush1.msra.mxu0 0.0
      %1045 = vmatprep.subr.mxu0 0.0
      %1046 = vmatpush1.msra.mxu0 0.0
      %1047 = vmatprep.subr.mxu0 0.0
      %1048 = vmatpush1.msra.mxu0 0.0
      %1049 = vmatprep.subr.mxu0 0.0
      %1050 = vmatpush1.msra.mxu0 0.0
      %1051 = vmatprep.subr.mxu0 0.0
      %1052 = vmatpush1.msra.mxu0 0.0
      %1053 = vmatprep.subr.mxu0 0.0
      %1054 = vmatpush1.msra.mxu0 0.0
      %1055 = vmatprep.subr.mxu0 0.0
      %1056 = vmatpush1.msra.mxu0 0.0
      %1057 = vmatprep.subr.mxu0 0.0
      %1058 = vmatpush1.msra.mxu0 0.0
      %1059 = vmatprep.subr.mxu0 0.0
      %1060 = vmatpush1.msra.mxu0 0.0
      %1061 = vmatprep.subr.mxu0 0.0
      %1062 = vmatpush1.msra.mxu0 0.0
      %1063 = vmatprep.subr.mxu0 0.0
      %1064 = vmatpush1.msra.mxu0 0.0
      %1065 = vmatprep.subr.mxu0 0.0
      %1066 = vmatpush1.msra.mxu0 0.0
      %1067 = vmatprep.subr.mxu0 0.0
      %1068 = vmatpush1.msra.mxu0 0.0
      %1069 = vmatprep.subr.mxu0 0.0
      %1070 = vmatpush1.msra.mxu0 0.0
      %1071 = vmatprep.subr.mxu0 0.0
      %1072 = vmatpush1.msra.mxu0 0.0
      %1073 = vmatprep.subr.mxu0 0.0
      %1074 = vmatpush1.msra.mxu0 0.0
      %1075 = vmatprep.subr.mxu0 0.0
      %1076 = vmatpush1.msra.mxu0 0.0
      %1077 = vmatprep.subr.mxu0 0.0
      %1078 = vmatpush1.msra.mxu0 0.0
      %1079 = vmatprep.mubr.f32.mxu0 0.0
      %1080 = vmatmul.mubr.f32.gmra.mrb[0].mxu0 %v1013
      %v1081 = vpop.f32.mrb[0].mxu0
      %v1082 = vadd.f32 0.0, %v1081
      %v1083 = vpop.f32.mrb[0].mxu0
      %v1084 = vadd.f32 0.0, %v1083
      %1085 = vdwg.mxu0
      %s1086 = scalar_lea.vmem %s2, 8
      %v1087 = vld [vmem:[%s1086] sm:$0xff]
      %1089 = vset.pattern.permute.xlu0 0
      %1090 = vperm.xlu0 %1089, %v1087
      %v1091 = vpop.permute.xlu0 %1090
      %v1093 = vmul.f32 %v1082, %v1091
      %v1094 = vmul.f32 %v1084, %v1091
      %1095 = vset.pattern.permute.xlu0 1
      %1096 = vperm.xlu0 %1095, %v1087
      %v1097 = vpop.permute.xlu0 %1096
      %v1099 = vadd.f32 %v1093, %v1097
      %v1100 = vadd.f32 %v1094, %v1097
      %v1101 = vmax.f32 %v1099, 0.0
      %v1102 = vmax.f32 %v1100, 0.0
      %1103 = vst [vmem:[#allocation2 + $0x8] sm:$0xff] %v1101
      %1104 = vst [vmem:[#allocation2 + $0x10] sm:$0xff] %v1102
      %v1105 = vld [vmem:[#allocation2] sm:$0xff]
      %v1106 = vld [vmem:[#allocation2 + $0x8] sm:$0xff]
      %v1107 = vld [vmem:[#allocation2 + $0x10] sm:$0xff]
      %v1108 = vld [vmem:[%s3] ss:$8 sm:$0x3]
      %v1110 = vlaneseq
      %v1111 = vshrl.u32 %v1110, 7
      %v1112 = vsub.s32 0, %v1111
      %v1113 = vrot.slane %v1108, %v1112
      %v1114 = vlaneseq
      %v1115 = vshrl.u32 %v1114, 7
      %v1116 = vsub.s32 1, %v1115
      %v1117 = vrot.slane %v1108, %v1116
      %1118 = vrot.lane.b32.xlu0 %v1113, 94
      %v1119 = vpop.permute.xlu0 %1118
      %1120 = vrot.lane.b32.xlu0 %v1117, 94
      %v1121 = vpop.permute.xlu0 %1120
      %v1122 = vsel %vm221, %v1119, %v1121
      %v1126 = vmul.f32 %v1105, %v1119
      %v1127 = vmul.f32 %v1106, %v1122
      %v1128 = vmul.f32 %v1107, %v1121
      %1132 = vrot.lane.b32.xlu0 %v1126, 34
      %v1133 = vpop.permute.xlu0 %1132
      %1134 = vrot.lane.b32.xlu0 %v1127, 34
      %v1135 = vpop.permute.xlu0 %1134
      %1136 = vrot.lane.b32.xlu0 %v1128, 34
      %v1137 = vpop.permute.xlu0 %1136
      %v1138 = vsel %vm238, %v1133, %v1135
      %v1139 = vsel %vm238, %v1135, %v1137
      %1142 = vst [vmem:[#allocation3] sm:$0xff] %v1138
      %1143 = vst [vmem:[#allocation3 + $0x8] sm:$0xff] %v1139
      %v1144 = vld [vmem:[#allocation2] sm:$0xff]
      %v1145 = vld [vmem:[#allocation2 + $0x8] sm:$0xff]
      %v1146 = vld [vmem:[#allocation2 + $0x10] sm:$0xff]
      %v1147 = vld [vmem:[%s248] ss:$8 sm:$0x3]
      %v1149 = vlaneseq
      %v1150 = vshrl.u32 %v1149, 7
      %v1151 = vsub.s32 0, %v1150
      %v1152 = vrot.slane %v1147, %v1151
      %v1153 = vlaneseq
      %v1154 = vshrl.u32 %v1153, 7
      %v1155 = vsub.s32 1, %v1154
      %v1156 = vrot.slane %v1147, %v1155
      %1157 = vrot.lane.b32.xlu0 %v1152, 96
      %v1158 = vpop.permute.xlu0 %1157
      %1159 = vrot.lane.b32.xlu0 %v1156, 96
      %v1160 = vpop.permute.xlu0 %1159
      %v1161 = vsel %vm263, %v1158, %v1160
      %v1165 = vmul.f32 %v1144, %v1158
      %v1166 = vmul.f32 %v1145, %v1161
      %v1167 = vmul.f32 %v1146, %v1160
      %1171 = vrot.lane.b32.xlu0 %v1165, 32
      %v1172 = vpop.permute.xlu0 %1171
      %1173 = vrot.lane.b32.xlu0 %v1166, 32
      %v1174 = vpop.permute.xlu0 %1173
      %1175 = vrot.lane.b32.xlu0 %v1167, 32
      %v1176 = vpop.permute.xlu0 %1175
      %v1177 = vsel %vm280, %v1172, %v1174
      %v1178 = vsel %vm280, %v1174, %v1176
      %1181 = vst [vmem:[#allocation3 + $0x10] sm:$0xff] %v1177
      %1182 = vst [vmem:[#allocation3 + $0x18] sm:$0xff] %v1178
      %v1183 = vld [vmem:[#allocation2] sm:$0xff]
      %v1184 = vld [vmem:[#allocation2 + $0x8] sm:$0xff]
      %v1185 = vld [vmem:[#allocation2 + $0x10] sm:$0xff]
      %v1186 = vld [vmem:[%s290] ss:$8 sm:$0x3]
      %v1188 = vlaneseq
      %v1189 = vshrl.u32 %v1188, 7
      %v1190 = vsub.s32 0, %v1189
      %v1191 = vrot.slane %v1186, %v1190
      %v1192 = vlaneseq
      %v1193 = vshrl.u32 %v1192, 7
      %v1194 = vsub.s32 1, %v1193
      %v1195 = vrot.slane %v1186, %v1194
      %1196 = vrot.lane.b32.xlu0 %v1191, 98
      %v1197 = vpop.permute.xlu0 %1196
      %1198 = vrot.lane.b32.xlu0 %v1195, 98
      %v1199 = vpop.permute.xlu0 %1198
      %v1200 = vsel %vm305, %v1197, %v1199
      %v1204 = vmul.f32 %v1183, %v1197
      %v1205 = vmul.f32 %v1184, %v1200
      %v1206 = vmul.f32 %v1185, %v1199
      %1210 = vrot.lane.b32.xlu0 %v1204, 30
      %v1211 = vpop.permute.xlu0 %1210
      %1212 = vrot.lane.b32.xlu0 %v1205, 30
      %v1213 = vpop.permute.xlu0 %1212
      %1214 = vrot.lane.b32.xlu0 %v1206, 30
      %v1215 = vpop.permute.xlu0 %1214
      %v1216 = vsel %vm322, %v1211, %v1213
      %v1217 = vsel %vm322, %v1213, %v1215
      %1220 = vst [vmem:[#allocation3 + $0x20] sm:$0xff] %v1216
      %1221 = vst [vmem:[#allocation3 + $0x28] sm:$0xff] %v1217
      %v1222 = vld [vmem:[#allocation2] sm:$0xff]
      %v1223 = vld [vmem:[#allocation2 + $0x8] sm:$0xff]
      %v1224 = vld [vmem:[#allocation2 + $0x10] sm:$0xff]
      %v1225 = vld [vmem:[%s332] ss:$8 sm:$0x3]
      %v1227 = vlaneseq
      %v1228 = vshrl.u32 %v1227, 7
      %v1229 = vsub.s32 0, %v1228
      %v1230 = vrot.slane %v1225, %v1229
      %v1231 = vlaneseq
      %v1232 = vshrl.u32 %v1231, 7
      %v1233 = vsub.s32 1, %v1232
      %v1234 = vrot.slane %v1225, %v1233
      %1235 = vrot.lane.b32.xlu0 %v1230, 126
      %v1236 = vpop.permute.xlu0 %1235
      %1237 = vrot.lane.b32.xlu0 %v1234, 126
      %v1238 = vpop.permute.xlu0 %1237
      %v1239 = vsel %vm347, %v1236, %v1238
      %v1243 = vmul.f32 %v1222, %v1236
      %v1244 = vmul.f32 %v1223, %v1239
      %v1245 = vmul.f32 %v1224, %v1238
      %1249 = vrot.lane.b32.xlu0 %v1243, 2
      %v1250 = vpop.permute.xlu0 %1249
      %1251 = vrot.lane.b32.xlu0 %v1244, 2
      %v1252 = vpop.permute.xlu0 %1251
      %1253 = vrot.lane.b32.xlu0 %v1245, 2
      %v1254 = vpop.permute.xlu0 %1253
      %v1255 = vsel %vm364, %v1250, %v1252
      %v1256 = vsel %vm364, %v1252, %v1254
      %1259 = vst [vmem:[#allocation3 + $0x30] sm:$0xff] %v1255
      %1260 = vst [vmem:[#allocation3 + $0x38] sm:$0xff] %v1256
      %v1261 = vld [vmem:[#allocation2 + $0x8] sm:$0xff]
      %v1262 = vld [vmem:[#allocation2 + $0x10] sm:$0xff]
      %v1263 = vld [vmem:[%s373] ss:$8 sm:$0x3]
      %v1265 = vlaneseq
      %v1266 = vshrl.u32 %v1265, 7
      %v1267 = vsub.s32 0, %v1266
      %v1268 = vrot.slane %v1263, %v1267
      %v1269 = vlaneseq
      %v1270 = vshrl.u32 %v1269, 7
      %v1271 = vsub.s32 1, %v1270
      %v1272 = vrot.slane %v1263, %v1271
      %v1275 = vmul.f32 %v1261, %v1268
      %v1276 = vmul.f32 %v1262, %v1272
      %1277 = vst [vmem:[#allocation3 + $0x40] sm:$0xff] %v1275
      %1278 = vst [vmem:[#allocation3 + $0x48] sm:$0xff] %v1276
      %v1279 = vld [vmem:[#allocation2 + $0x8] sm:$0xff]
      %v1280 = vld [vmem:[#allocation2 + $0x10] sm:$0xff]
      %v1281 = vld [vmem:[#allocation2 + $0x18] sm:$0xff]
      %v1282 = vld [vmem:[%s393] ss:$8 sm:$0x3]
      %v1284 = vlaneseq
      %v1285 = vshrl.u32 %v1284, 7
      %v1286 = vsub.s32 0, %v1285
      %v1287 = vrot.slane %v1282, %v1286
      %v1288 = vlaneseq
      %v1289 = vshrl.u32 %v1288, 7
      %v1290 = vsub.s32 1, %v1289
      %v1291 = vrot.slane %v1282, %v1290
      %1292 = vrot.lane.b32.xlu0 %v1287, 2
      %v1293 = vpop.permute.xlu0 %1292
      %1294 = vrot.lane.b32.xlu0 %v1291, 2
      %v1295 = vpop.permute.xlu0 %1294
      %v1296 = vsel %vm364, %v1293, %v1295
      %v1300 = vmul.f32 %v1279, %v1293
      %v1301 = vmul.f32 %v1280, %v1296
      %v1302 = vmul.f32 %v1281, %v1295
      %1306 = vrot.lane.b32.xlu0 %v1300, 126
      %v1307 = vpop.permute.xlu0 %1306
      %1308 = vrot.lane.b32.xlu0 %v1301, 126
      %v1309 = vpop.permute.xlu0 %1308
      %1310 = vrot.lane.b32.xlu0 %v1302, 126
      %v1311 = vpop.permute.xlu0 %1310
      %v1312 = vsel %vm347, %v1307, %v1309
      %v1313 = vsel %vm347, %v1309, %v1311
      %1316 = vst [vmem:[#allocation3 + $0x50] sm:$0xff] %v1312
      %1317 = vst [vmem:[#allocation3 + $0x58] sm:$0xff] %v1313
      %v1318 = vld [vmem:[#allocation2 + $0x8] sm:$0xff]
      %v1319 = vld [vmem:[#allocation2 + $0x10] sm:$0xff]
      %v1320 = vld [vmem:[#allocation2 + $0x18] sm:$0xff]
      %v1321 = vld [vmem:[%s433] ss:$8 sm:$0x3]
      %v1323 = vlaneseq
      %v1324 = vshrl.u32 %v1323, 7
      %v1325 = vsub.s32 0, %v1324
      %v1326 = vrot.slane %v1321, %v1325
      %v1327 = vlaneseq
      %v1328 = vshrl.u32 %v1327, 7
      %v1329 = vsub.s32 1, %v1328
      %v1330 = vrot.slane %v1321, %v1329
      %1331 = vrot.lane.b32.xlu0 %v1326, 30
      %v1332 = vpop.permute.xlu0 %1331
      %1333 = vrot.lane.b32.xlu0 %v1330, 30
      %v1334 = vpop.permute.xlu0 %1333
      %v1335 = vsel %vm322, %v1332, %v1334
      %v1339 = vmul.f32 %v1318, %v1332
      %v1340 = vmul.f32 %v1319, %v1335
      %v1341 = vmul.f32 %v1320, %v1334
      %1345 = vrot.lane.b32.xlu0 %v1339, 98
      %v1346 = vpop.permute.xlu0 %1345
      %1347 = vrot.lane.b32.xlu0 %v1340, 98
      %v1348 = vpop.permute.xlu0 %1347
      %1349 = vrot.lane.b32.xlu0 %v1341, 98
      %v1350 = vpop.permute.xlu0 %1349
      %v1351 = vsel %vm305, %v1346, %v1348
      %v1352 = vsel %vm305, %v1348, %v1350
      %1355 = vst [vmem:[#allocation3 + $0x60] sm:$0xff] %v1351
      %1356 = vst [vmem:[#allocation3 + $0x68] sm:$0xff] %v1352
      %v1357 = vld [vmem:[#allocation2 + $0x8] sm:$0xff]
      %v1358 = vld [vmem:[#allocation2 + $0x10] sm:$0xff]
      %v1359 = vld [vmem:[#allocation2 + $0x18] sm:$0xff]
      %v1360 = vld [vmem:[%s473] ss:$8 sm:$0x3]
      %v1362 = vlaneseq
      %v1363 = vshrl.u32 %v1362, 7
      %v1364 = vsub.s32 0, %v1363
      %v1365 = vrot.slane %v1360, %v1364
      %v1366 = vlaneseq
      %v1367 = vshrl.u32 %v1366, 7
      %v1368 = vsub.s32 1, %v1367
      %v1369 = vrot.slane %v1360, %v1368
      %1370 = vrot.lane.b32.xlu0 %v1365, 32
      %v1371 = vpop.permute.xlu0 %1370
      %1372 = vrot.lane.b32.xlu0 %v1369, 32
      %v1373 = vpop.permute.xlu0 %1372
      %v1374 = vsel %vm280, %v1371, %v1373
      %v1378 = vmul.f32 %v1357, %v1371
      %v1379 = vmul.f32 %v1358, %v1374
      %v1380 = vmul.f32 %v1359, %v1373
      %1384 = vrot.lane.b32.xlu0 %v1378, 96
      %v1385 = vpop.permute.xlu0 %1384
      %1386 = vrot.lane.b32.xlu0 %v1379, 96
      %v1387 = vpop.permute.xlu0 %1386
      %1388 = vrot.lane.b32.xlu0 %v1380, 96
      %v1389 = vpop.permute.xlu0 %1388
      %v1390 = vsel %vm263, %v1385, %v1387
      %v1391 = vsel %vm263, %v1387, %v1389
      %1394 = vst [vmem:[#allocation3 + $0x70] sm:$0xff] %v1390
      %1395 = vst [vmem:[#allocation3 + $0x78] sm:$0xff] %v1391
      %v1396 = vld [vmem:[#allocation2 + $0x8] sm:$0xff]
      %v1397 = vld [vmem:[#allocation2 + $0x10] sm:$0xff]
      %v1398 = vld [vmem:[#allocation2 + $0x18] sm:$0xff]
      %v1399 = vld [vmem:[%s513] ss:$8 sm:$0x3]
      %v1401 = vlaneseq
      %v1402 = vshrl.u32 %v1401, 7
      %v1403 = vsub.s32 0, %v1402
      %v1404 = vrot.slane %v1399, %v1403
      %v1405 = vlaneseq
      %v1406 = vshrl.u32 %v1405, 7
      %v1407 = vsub.s32 1, %v1406
      %v1408 = vrot.slane %v1399, %v1407
      %1409 = vrot.lane.b32.xlu0 %v1404, 34
      %v1410 = vpop.permute.xlu0 %1409
      %1411 = vrot.lane.b32.xlu0 %v1408, 34
      %v1412 = vpop.permute.xlu0 %1411
      %v1413 = vsel %vm238, %v1410, %v1412
      %v1417 = vmul.f32 %v1396, %v1410
      %v1418 = vmul.f32 %v1397, %v1413
      %v1419 = vmul.f32 %v1398, %v1412
      %1423 = vrot.lane.b32.xlu0 %v1417, 94
      %v1424 = vpop.permute.xlu0 %1423
      %1425 = vrot.lane.b32.xlu0 %v1418, 94
      %v1426 = vpop.permute.xlu0 %1425
      %1427 = vrot.lane.b32.xlu0 %v1419, 94
      %v1428 = vpop.permute.xlu0 %1427
      %v1429 = vsel %vm221, %v1424, %v1426
      %v1430 = vsel %vm221, %v1426, %v1428
      %1433 = vst [vmem:[#allocation3 + $0x80] sm:$0xff] %v1429
      %1434 = vst [vmem:[#allocation3 + $0x88] sm:$0xff] %v1430
      %s1435 = scalar_lea.vmem %s1, 16
      %v1436 = vld [vmem:[%s1435] sm:$0xff]
      %v1437 = vld [vmem:[#allocation3] sm:$0xff]
      %v1438 = vld [vmem:[#allocation3 + $0x8] sm:$0xff]
      %v1439 = vld [vmem:[#allocation3 + $0x10] sm:$0xff]
      %v1440 = vld [vmem:[#allocation3 + $0x18] sm:$0xff]
      %v1441 = vld [vmem:[#allocation3 + $0x20] sm:$0xff]
      %v1442 = vld [vmem:[#allocation3 + $0x28] sm:$0xff]
      %v1443 = vld [vmem:[#allocation3 + $0x30] sm:$0xff]
      %v1444 = vld [vmem:[#allocation3 + $0x38] sm:$0xff]
      %v1445 = vld [vmem:[#allocation3 + $0x40] sm:$0xff]
      %v1446 = vld [vmem:[#allocation3 + $0x48] sm:$0xff]
      %v1447 = vld [vmem:[#allocation3 + $0x50] sm:$0xff]
      %v1448 = vld [vmem:[#allocation3 + $0x58] sm:$0xff]
      %v1449 = vld [vmem:[#allocation3 + $0x60] sm:$0xff]
      %v1450 = vld [vmem:[#allocation3 + $0x68] sm:$0xff]
      %v1451 = vld [vmem:[#allocation3 + $0x70] sm:$0xff]
      %v1452 = vld [vmem:[#allocation3 + $0x78] sm:$0xff]
      %v1453 = vld [vmem:[#allocation3 + $0x80] sm:$0xff]
      %v1454 = vld [vmem:[#allocation3 + $0x88] sm:$0xff]
      %v1456 = vsel %vm569, %v1436, 0
      %1458 = vmatprep.subr.mxu0 %v1438
      %1459 = vmatpush1.msra.mxu0 %v1437
      %1460 = vmatprep.subr.mxu0 %v1440
      %1461 = vmatpush1.msra.mxu0 %v1439
      %1462 = vmatprep.subr.mxu0 %v1442
      %1463 = vmatpush1.msra.mxu0 %v1441
      %1464 = vmatprep.subr.mxu0 %v1444
      %1465 = vmatpush1.msra.mxu0 %v1443
      %1466 = vmatprep.subr.mxu0 %v1446
      %1467 = vmatpush1.msra.mxu0 %v1445
      %1468 = vmatprep.subr.mxu0 %v1448
      %1469 = vmatpush1.msra.mxu0 %v1447
      %1470 = vmatprep.subr.mxu0 %v1450
      %1471 = vmatpush1.msra.mxu0 %v1449
      %1472 = vmatprep.subr.mxu0 %v1452
      %1473 = vmatpush1.msra.mxu0 %v1451
      %1474 = vmatprep.subr.mxu0 %v1454
      %1475 = vmatpush1.msra.mxu0 %v1453
      %1476 = vmatprep.subr.mxu0 0.0
      %1477 = vmatpush1.msra.mxu0 0.0
      %1478 = vmatprep.subr.mxu0 0.0
      %1479 = vmatpush1.msra.mxu0 0.0
      %1480 = vmatprep.subr.mxu0 0.0
      %1481 = vmatpush1.msra.mxu0 0.0
      %1482 = vmatprep.subr.mxu0 0.0
      %1483 = vmatpush1.msra.mxu0 0.0
      %1484 = vmatprep.subr.mxu0 0.0
      %1485 = vmatpush1.msra.mxu0 0.0
      %1486 = vmatprep.subr.mxu0 0.0
      %1487 = vmatpush1.msra.mxu0 0.0
      %1488 = vmatprep.subr.mxu0 0.0
      %1489 = vmatpush1.msra.mxu0 0.0
      %1490 = vmatprep.subr.mxu0 0.0
      %1491 = vmatpush1.msra.mxu0 0.0
      %1492 = vmatprep.subr.mxu0 0.0
      %1493 = vmatpush1.msra.mxu0 0.0
      %1494 = vmatprep.subr.mxu0 0.0
      %1495 = vmatpush1.msra.mxu0 0.0
      %1496 = vmatprep.subr.mxu0 0.0
      %1497 = vmatpush1.msra.mxu0 0.0
      %1498 = vmatprep.subr.mxu0 0.0
      %1499 = vmatpush1.msra.mxu0 0.0
      %1500 = vmatprep.subr.mxu0 0.0
      %1501 = vmatpush1.msra.mxu0 0.0
      %1502 = vmatprep.subr.mxu0 0.0
      %1503 = vmatpush1.msra.mxu0 0.0
      %1504 = vmatprep.subr.mxu0 0.0
      %1505 = vmatpush1.msra.mxu0 0.0
      %1506 = vmatprep.subr.mxu0 0.0
      %1507 = vmatpush1.msra.mxu0 0.0
      %1508 = vmatprep.subr.mxu0 0.0
      %1509 = vmatpush1.msra.mxu0 0.0
      %1510 = vmatprep.subr.mxu0 0.0
      %1511 = vmatpush1.msra.mxu0 0.0
      %1512 = vmatprep.subr.mxu0 0.0
      %1513 = vmatpush1.msra.mxu0 0.0
      %1514 = vmatprep.subr.mxu0 0.0
      %1515 = vmatpush1.msra.mxu0 0.0
      %1516 = vmatprep.subr.mxu0 0.0
      %1517 = vmatpush1.msra.mxu0 0.0
      %1518 = vmatprep.subr.mxu0 0.0
      %1519 = vmatpush1.msra.mxu0 0.0
      %1520 = vmatprep.subr.mxu0 0.0
      %1521 = vmatpush1.msra.mxu0 0.0
      %1522 = vmatprep.mubr.f32.mxu0 0.0
      %1523 = vmatmul.mubr.f32.gmra.mrb[0].mxu0 %v1456
      %v1524 = vpop.f32.mrb[0].mxu0
      %v1525 = vadd.f32 0.0, %v1524
      %v1526 = vpop.f32.mrb[0].mxu0
      %v1527 = vadd.f32 0.0, %v1526
      %1528 = vdwg.mxu0
      %s1529 = scalar_lea.vmem %s2, 16
      %v1530 = vld [vmem:[%s1529] sm:$0xff]
      %1532 = vset.pattern.permute.xlu0 0
      %1533 = vperm.xlu0 %1532, %v1530
      %v1534 = vpop.permute.xlu0 %1533
      %v1536 = vmul.f32 %v1525, %v1534
      %v1537 = vmul.f32 %v1527, %v1534
      %1538 = vset.pattern.permute.xlu0 1
      %1539 = vperm.xlu0 %1538, %v1530
      %v1540 = vpop.permute.xlu0 %1539
      %v1542 = vadd.f32 %v1536, %v1540
      %v1543 = vadd.f32 %v1537, %v1540
      %v1544 = vmax.f32 %v1542, 0.0
      %v1545 = vmax.f32 %v1543, 0.0
      %1546 = vst [vmem:[#allocation2 + $0x8] sm:$0xff] %v1544
      %1547 = vst [vmem:[#allocation2 + $0x10] sm:$0xff] %v1545
      %v1548 = vld [vmem:[#allocation2] sm:$0xff]
      %v1549 = vld [vmem:[#allocation2 + $0x8] sm:$0xff]
      %v1550 = vld [vmem:[#allocation2 + $0x10] sm:$0xff]
      %v1551 = vld [vmem:[%s3] ss:$8 sm:$0x3]
      %v1553 = vlaneseq
      %v1554 = vshrl.u32 %v1553, 7
      %v1555 = vsub.s32 0, %v1554
      %v1556 = vrot.slane %v1551, %v1555
      %v1557 = vlaneseq
      %v1558 = vshrl.u32 %v1557, 7
      %v1559 = vsub.s32 1, %v1558
      %v1560 = vrot.slane %v1551, %v1559
      %1561 = vrot.lane.b32.xlu0 %v1556, 94
      %v1562 = vpop.permute.xlu0 %1561
      %1563 = vrot.lane.b32.xlu0 %v1560, 94
      %v1564 = vpop.permute.xlu0 %1563
      %v1565 = vsel %vm221, %v1562, %v1564
      %v1569 = vmul.f32 %v1548, %v1562
      %v1570 = vmul.f32 %v1549, %v1565
      %v1571 = vmul.f32 %v1550, %v1564
      %1575 = vrot.lane.b32.xlu0 %v1569, 34
      %v1576 = vpop.permute.xlu0 %1575
      %1577 = vrot.lane.b32.xlu0 %v1570, 34
      %v1578 = vpop.permute.xlu0 %1577
      %1579 = vrot.lane.b32.xlu0 %v1571, 34
      %v1580 = vpop.permute.xlu0 %1579
      %v1581 = vsel %vm238, %v1576, %v1578
      %v1582 = vsel %vm238, %v1578, %v1580
      %1585 = vst [vmem:[#allocation3] sm:$0xff] %v1581
      %1586 = vst [vmem:[#allocation3 + $0x8] sm:$0xff] %v1582
      %v1587 = vld [vmem:[#allocation2] sm:$0xff]
      %v1588 = vld [vmem:[#allocation2 + $0x8] sm:$0xff]
      %v1589 = vld [vmem:[#allocation2 + $0x10] sm:$0xff]
      %v1590 = vld [vmem:[%s248] ss:$8 sm:$0x3]
      %v1592 = vlaneseq
      %v1593 = vshrl.u32 %v1592, 7
      %v1594 = vsub.s32 0, %v1593
      %v1595 = vrot.slane %v1590, %v1594
      %v1596 = vlaneseq
      %v1597 = vshrl.u32 %v1596, 7
      %v1598 = vsub.s32 1, %v1597
      %v1599 = vrot.slane %v1590, %v1598
      %1600 = vrot.lane.b32.xlu0 %v1595, 96
      %v1601 = vpop.permute.xlu0 %1600
      %1602 = vrot.lane.b32.xlu0 %v1599, 96
      %v1603 = vpop.permute.xlu0 %1602
      %v1604 = vsel %vm263, %v1601, %v1603
      %v1608 = vmul.f32 %v1587, %v1601
      %v1609 = vmul.f32 %v1588, %v1604
      %v1610 = vmul.f32 %v1589, %v1603
      %1614 = vrot.lane.b32.xlu0 %v1608, 32
      %v1615 = vpop.permute.xlu0 %1614
      %1616 = vrot.lane.b32.xlu0 %v1609, 32
      %v1617 = vpop.permute.xlu0 %1616
      %1618 = vrot.lane.b32.xlu0 %v1610, 32
      %v1619 = vpop.permute.xlu0 %1618
      %v1620 = vsel %vm280, %v1615, %v1617
      %v1621 = vsel %vm280, %v1617, %v1619
      %1624 = vst [vmem:[#allocation3 + $0x10] sm:$0xff] %v1620
      %1625 = vst [vmem:[#allocation3 + $0x18] sm:$0xff] %v1621
      %v1626 = vld [vmem:[#allocation2] sm:$0xff]
      %v1627 = vld [vmem:[#allocation2 + $0x8] sm:$0xff]
      %v1628 = vld [vmem:[#allocation2 + $0x10] sm:$0xff]
      %v1629 = vld [vmem:[%s290] ss:$8 sm:$0x3]
      %v1631 = vlaneseq
      %v1632 = vshrl.u32 %v1631, 7
      %v1633 = vsub.s32 0, %v1632
      %v1634 = vrot.slane %v1629, %v1633
      %v1635 = vlaneseq
      %v1636 = vshrl.u32 %v1635, 7
      %v1637 = vsub.s32 1, %v1636
      %v1638 = vrot.slane %v1629, %v1637
      %1639 = vrot.lane.b32.xlu0 %v1634, 98
      %v1640 = vpop.permute.xlu0 %1639
      %1641 = vrot.lane.b32.xlu0 %v1638, 98
      %v1642 = vpop.permute.xlu0 %1641
      %v1643 = vsel %vm305, %v1640, %v1642
      %v1647 = vmul.f32 %v1626, %v1640
      %v1648 = vmul.f32 %v1627, %v1643
      %v1649 = vmul.f32 %v1628, %v1642
      %1653 = vrot.lane.b32.xlu0 %v1647, 30
      %v1654 = vpop.permute.xlu0 %1653
      %1655 = vrot.lane.b32.xlu0 %v1648, 30
      %v1656 = vpop.permute.xlu0 %1655
      %1657 = vrot.lane.b32.xlu0 %v1649, 30
      %v1658 = vpop.permute.xlu0 %1657
      %v1659 = vsel %vm322, %v1654, %v1656
      %v1660 = vsel %vm322, %v1656, %v1658
      %1663 = vst [vmem:[#allocation3 + $0x20] sm:$0xff] %v1659
      %1664 = vst [vmem:[#allocation3 + $0x28] sm:$0xff] %v1660
      %v1665 = vld [vmem:[#allocation2] sm:$0xff]
      %v1666 = vld [vmem:[#allocation2 + $0x8] sm:$0xff]
      %v1667 = vld [vmem:[#allocation2 + $0x10] sm:$0xff]
      %v1668 = vld [vmem:[%s332] ss:$8 sm:$0x3]
      %v1670 = vlaneseq
      %v1671 = vshrl.u32 %v1670, 7
      %v1672 = vsub.s32 0, %v1671
      %v1673 = vrot.slane %v1668, %v1672
      %v1674 = vlaneseq
      %v1675 = vshrl.u32 %v1674, 7
      %v1676 = vsub.s32 1, %v1675
      %v1677 = vrot.slane %v1668, %v1676
      %1678 = vrot.lane.b32.xlu0 %v1673, 126
      %v1679 = vpop.permute.xlu0 %1678
      %1680 = vrot.lane.b32.xlu0 %v1677, 126
      %v1681 = vpop.permute.xlu0 %1680
      %v1682 = vsel %vm347, %v1679, %v1681
      %v1686 = vmul.f32 %v1665, %v1679
      %v1687 = vmul.f32 %v1666, %v1682
      %v1688 = vmul.f32 %v1667, %v1681
      %1692 = vrot.lane.b32.xlu0 %v1686, 2
      %v1693 = vpop.permute.xlu0 %1692
      %1694 = vrot.lane.b32.xlu0 %v1687, 2
      %v1695 = vpop.permute.xlu0 %1694
      %1696 = vrot.lane.b32.xlu0 %v1688, 2
      %v1697 = vpop.permute.xlu0 %1696
      %v1698 = vsel %vm364, %v1693, %v1695
      %v1699 = vsel %vm364, %v1695, %v1697
      %1702 = vst [vmem:[#allocation3 + $0x30] sm:$0xff] %v1698
      %1703 = vst [vmem:[#allocation3 + $0x38] sm:$0xff] %v1699
      %v1704 = vld [vmem:[#allocation2 + $0x8] sm:$0xff]
      %v1705 = vld [vmem:[#allocation2 + $0x10] sm:$0xff]
      %v1706 = vld [vmem:[%s373] ss:$8 sm:$0x3]
      %v1708 = vlaneseq
      %v1709 = vshrl.u32 %v1708, 7
      %v1710 = vsub.s32 0, %v1709
      %v1711 = vrot.slane %v1706, %v1710
      %v1712 = vlaneseq
      %v1713 = vshrl.u32 %v1712, 7
      %v1714 = vsub.s32 1, %v1713
      %v1715 = vrot.slane %v1706, %v1714
      %v1718 = vmul.f32 %v1704, %v1711
      %v1719 = vmul.f32 %v1705, %v1715
      %1720 = vst [vmem:[#allocation3 + $0x40] sm:$0xff] %v1718
      %1721 = vst [vmem:[#allocation3 + $0x48] sm:$0xff] %v1719
      %v1722 = vld [vmem:[#allocation2 + $0x8] sm:$0xff]
      %v1723 = vld [vmem:[#allocation2 + $0x10] sm:$0xff]
      %v1724 = vld [vmem:[#allocation2 + $0x18] sm:$0xff]
      %v1725 = vld [vmem:[%s393] ss:$8 sm:$0x3]
      %v1727 = vlaneseq
      %v1728 = vshrl.u32 %v1727, 7
      %v1729 = vsub.s32 0, %v1728
      %v1730 = vrot.slane %v1725, %v1729
      %v1731 = vlaneseq
      %v1732 = vshrl.u32 %v1731, 7
      %v1733 = vsub.s32 1, %v1732
      %v1734 = vrot.slane %v1725, %v1733
      %1735 = vrot.lane.b32.xlu0 %v1730, 2
      %v1736 = vpop.permute.xlu0 %1735
      %1737 = vrot.lane.b32.xlu0 %v1734, 2
      %v1738 = vpop.permute.xlu0 %1737
      %v1739 = vsel %vm364, %v1736, %v1738
      %v1743 = vmul.f32 %v1722, %v1736
      %v1744 = vmul.f32 %v1723, %v1739
      %v1745 = vmul.f32 %v1724, %v1738
      %1749 = vrot.lane.b32.xlu0 %v1743, 126
      %v1750 = vpop.permute.xlu0 %1749
      %1751 = vrot.lane.b32.xlu0 %v1744, 126
      %v1752 = vpop.permute.xlu0 %1751
      %1753 = vrot.lane.b32.xlu0 %v1745, 126
      %v1754 = vpop.permute.xlu0 %1753
      %v1755 = vsel %vm347, %v1750, %v1752
      %v1756 = vsel %vm347, %v1752, %v1754
      %1759 = vst [vmem:[#allocation3 + $0x50] sm:$0xff] %v1755
      %1760 = vst [vmem:[#allocation3 + $0x58] sm:$0xff] %v1756
      %v1761 = vld [vmem:[#allocation2 + $0x8] sm:$0xff]
      %v1762 = vld [vmem:[#allocation2 + $0x10] sm:$0xff]
      %v1763 = vld [vmem:[#allocation2 + $0x18] sm:$0xff]
      %v1764 = vld [vmem:[%s433] ss:$8 sm:$0x3]
      %v1766 = vlaneseq
      %v1767 = vshrl.u32 %v1766, 7
      %v1768 = vsub.s32 0, %v1767
      %v1769 = vrot.slane %v1764, %v1768
      %v1770 = vlaneseq
      %v1771 = vshrl.u32 %v1770, 7
      %v1772 = vsub.s32 1, %v1771
      %v1773 = vrot.slane %v1764, %v1772
      %1774 = vrot.lane.b32.xlu0 %v1769, 30
      %v1775 = vpop.permute.xlu0 %1774
      %1776 = vrot.lane.b32.xlu0 %v1773, 30
      %v1777 = vpop.permute.xlu0 %1776
      %v1778 = vsel %vm322, %v1775, %v1777
      %v1782 = vmul.f32 %v1761, %v1775
      %v1783 = vmul.f32 %v1762, %v1778
      %v1784 = vmul.f32 %v1763, %v1777
      %1788 = vrot.lane.b32.xlu0 %v1782, 98
      %v1789 = vpop.permute.xlu0 %1788
      %1790 = vrot.lane.b32.xlu0 %v1783, 98
      %v1791 = vpop.permute.xlu0 %1790
      %1792 = vrot.lane.b32.xlu0 %v1784, 98
      %v1793 = vpop.permute.xlu0 %1792
      %v1794 = vsel %vm305, %v1789, %v1791
      %v1795 = vsel %vm305, %v1791, %v1793
      %1798 = vst [vmem:[#allocation3 + $0x60] sm:$0xff] %v1794
      %1799 = vst [vmem:[#allocation3 + $0x68] sm:$0xff] %v1795
      %v1800 = vld [vmem:[#allocation2 + $0x8] sm:$0xff]
      %v1801 = vld [vmem:[#allocation2 + $0x10] sm:$0xff]
      %v1802 = vld [vmem:[#allocation2 + $0x18] sm:$0xff]
      %v1803 = vld [vmem:[%s473] ss:$8 sm:$0x3]
      %v1805 = vlaneseq
      %v1806 = vshrl.u32 %v1805, 7
      %v1807 = vsub.s32 0, %v1806
      %v1808 = vrot.slane %v1803, %v1807
      %v1809 = vlaneseq
      %v1810 = vshrl.u32 %v1809, 7
      %v1811 = vsub.s32 1, %v1810
      %v1812 = vrot.slane %v1803, %v1811
      %1813 = vrot.lane.b32.xlu0 %v1808, 32
      %v1814 = vpop.permute.xlu0 %1813
      %1815 = vrot.lane.b32.xlu0 %v1812, 32
      %v1816 = vpop.permute.xlu0 %1815
      %v1817 = vsel %vm280, %v1814, %v1816
      %v1821 = vmul.f32 %v1800, %v1814
      %v1822 = vmul.f32 %v1801, %v1817
      %v1823 = vmul.f32 %v1802, %v1816
      %1827 = vrot.lane.b32.xlu0 %v1821, 96
      %v1828 = vpop.permute.xlu0 %1827
      %1829 = vrot.lane.b32.xlu0 %v1822, 96
      %v1830 = vpop.permute.xlu0 %1829
      %1831 = vrot.lane.b32.xlu0 %v1823, 96
      %v1832 = vpop.permute.xlu0 %1831
      %v1833 = vsel %vm263, %v1828, %v1830
      %v1834 = vsel %vm263, %v1830, %v1832
      %1837 = vst [vmem:[#allocation3 + $0x70] sm:$0xff] %v1833
      %1838 = vst [vmem:[#allocation3 + $0x78] sm:$0xff] %v1834
      %v1839 = vld [vmem:[#allocation2 + $0x8] sm:$0xff]
      %v1840 = vld [vmem:[#allocation2 + $0x10] sm:$0xff]
      %v1841 = vld [vmem:[#allocation2 + $0x18] sm:$0xff]
      %v1842 = vld [vmem:[%s513] ss:$8 sm:$0x3]
      %v1844 = vlaneseq
      %v1845 = vshrl.u32 %v1844, 7
      %v1846 = vsub.s32 0, %v1845
      %v1847 = vrot.slane %v1842, %v1846
      %v1848 = vlaneseq
      %v1849 = vshrl.u32 %v1848, 7
      %v1850 = vsub.s32 1, %v1849
      %v1851 = vrot.slane %v1842, %v1850
      %1852 = vrot.lane.b32.xlu0 %v1847, 34
      %v1853 = vpop.permute.xlu0 %1852
      %1854 = vrot.lane.b32.xlu0 %v1851, 34
      %v1855 = vpop.permute.xlu0 %1854
      %v1856 = vsel %vm238, %v1853, %v1855
      %v1860 = vmul.f32 %v1839, %v1853
      %v1861 = vmul.f32 %v1840, %v1856
      %v1862 = vmul.f32 %v1841, %v1855
      %1866 = vrot.lane.b32.xlu0 %v1860, 94
      %v1867 = vpop.permute.xlu0 %1866
      %1868 = vrot.lane.b32.xlu0 %v1861, 94
      %v1869 = vpop.permute.xlu0 %1868
      %1870 = vrot.lane.b32.xlu0 %v1862, 94
      %v1871 = vpop.permute.xlu0 %1870
      %v1872 = vsel %vm221, %v1867, %v1869
      %v1873 = vsel %vm221, %v1869, %v1871
      %1876 = vst [vmem:[#allocation3 + $0x80] sm:$0xff] %v1872
      %1877 = vst [vmem:[#allocation3 + $0x88] sm:$0xff] %v1873
      %s1878 = scalar_lea.vmem %s1, 24
      %v1879 = vld [vmem:[%s1878] sm:$0xff]
      %v1880 = vld [vmem:[#allocation3] sm:$0xff]
      %v1881 = vld [vmem:[#allocation3 + $0x8] sm:$0xff]
      %v1882 = vld [vmem:[#allocation3 + $0x10] sm:$0xff]
      %v1883 = vld [vmem:[#allocation3 + $0x18] sm:$0xff]
      %v1884 = vld [vmem:[#allocation3 + $0x20] sm:$0xff]
      %v1885 = vld [vmem:[#allocation3 + $0x28] sm:$0xff]
      %v1886 = vld [vmem:[#allocation3 + $0x30] sm:$0xff]
      %v1887 = vld [vmem:[#allocation3 + $0x38] sm:$0xff]
      %v1888 = vld [vmem:[#allocation3 + $0x40] sm:$0xff]
      %v1889 = vld [vmem:[#allocation3 + $0x48] sm:$0xff]
      %v1890 = vld [vmem:[#allocation3 + $0x50] sm:$0xff]
      %v1891 = vld [vmem:[#allocation3 + $0x58] sm:$0xff]
      %v1892 = vld [vmem:[#allocation3 + $0x60] sm:$0xff]
      %v1893 = vld [vmem:[#allocation3 + $0x68] sm:$0xff]
      %v1894 = vld [vmem:[#allocation3 + $0x70] sm:$0xff]
      %v1895 = vld [vmem:[#allocation3 + $0x78] sm:$0xff]
      %v1896 = vld [vmem:[#allocation3 + $0x80] sm:$0xff]
      %v1897 = vld [vmem:[#allocation3 + $0x88] sm:$0xff]
      %v1899 = vsel %vm569, %v1879, 0
      %1901 = vmatprep.subr.mxu0 %v1881
      %1902 = vmatpush1.msra.mxu0 %v1880
      %1903 = vmatprep.subr.mxu0 %v1883
      %1904 = vmatpush1.msra.mxu0 %v1882
      %1905 = vmatprep.subr.mxu0 %v1885
      %1906 = vmatpush1.msra.mxu0 %v1884
      %1907 = vmatprep.subr.mxu0 %v1887
      %1908 = vmatpush1.msra.mxu0 %v1886
      %1909 = vmatprep.subr.mxu0 %v1889
      %1910 = vmatpush1.msra.mxu0 %v1888
      %1911 = vmatprep.subr.mxu0 %v1891
      %1912 = vmatpush1.msra.mxu0 %v1890
      %1913 = vmatprep.subr.mxu0 %v1893
      %1914 = vmatpush1.msra.mxu0 %v1892
      %1915 = vmatprep.subr.mxu0 %v1895
      %1916 = vmatpush1.msra.mxu0 %v1894
      %1917 = vmatprep.subr.mxu0 %v1897
      %1918 = vmatpush1.msra.mxu0 %v1896
      %1919 = vmatprep.subr.mxu0 0.0
      %1920 = vmatpush1.msra.mxu0 0.0
      %1921 = vmatprep.subr.mxu0 0.0
      %1922 = vmatpush1.msra.mxu0 0.0
      %1923 = vmatprep.subr.mxu0 0.0
      %1924 = vmatpush1.msra.mxu0 0.0
      %1925 = vmatprep.subr.mxu0 0.0
      %1926 = vmatpush1.msra.mxu0 0.0
      %1927 = vmatprep.subr.mxu0 0.0
      %1928 = vmatpush1.msra.mxu0 0.0
      %1929 = vmatprep.subr.mxu0 0.0
      %1930 = vmatpush1.msra.mxu0 0.0
      %1931 = vmatprep.subr.mxu0 0.0
      %1932 = vmatpush1.msra.mxu0 0.0
      %1933 = vmatprep.subr.mxu0 0.0
      %1934 = vmatpush1.msra.mxu0 0.0
      %1935 = vmatprep.subr.mxu0 0.0
      %1936 = vmatpush1.msra.mxu0 0.0
      %1937 = vmatprep.subr.mxu0 0.0
      %1938 = vmatpush1.msra.mxu0 0.0
      %1939 = vmatprep.subr.mxu0 0.0
      %1940 = vmatpush1.msra.mxu0 0.0
      %1941 = vmatprep.subr.mxu0 0.0
      %1942 = vmatpush1.msra.mxu0 0.0
      %1943 = vmatprep.subr.mxu0 0.0
      %1944 = vmatpush1.msra.mxu0 0.0
      %1945 = vmatprep.subr.mxu0 0.0
      %1946 = vmatpush1.msra.mxu0 0.0
      %1947 = vmatprep.subr.mxu0 0.0
      %1948 = vmatpush1.msra.mxu0 0.0
      %1949 = vmatprep.subr.mxu0 0.0
      %1950 = vmatpush1.msra.mxu0 0.0
      %1951 = vmatprep.subr.mxu0 0.0
      %1952 = vmatpush1.msra.mxu0 0.0
      %1953 = vmatprep.subr.mxu0 0.0
      %1954 = vmatpush1.msra.mxu0 0.0
      %1955 = vmatprep.subr.mxu0 0.0
      %1956 = vmatpush1.msra.mxu0 0.0
      %1957 = vmatprep.subr.mxu0 0.0
      %1958 = vmatpush1.msra.mxu0 0.0
      %1959 = vmatprep.subr.mxu0 0.0
      %1960 = vmatpush1.msra.mxu0 0.0
      %1961 = vmatprep.subr.mxu0 0.0
      %1962 = vmatpush1.msra.mxu0 0.0
      %1963 = vmatprep.subr.mxu0 0.0
      %1964 = vmatpush1.msra.mxu0 0.0
      %1965 = vmatprep.mubr.f32.mxu0 0.0
      %1966 = vmatmul.mubr.f32.gmra.mrb[0].mxu0 %v1899
      %v1967 = vpop.f32.mrb[0].mxu0
      %v1968 = vadd.f32 0.0, %v1967
      %v1969 = vpop.f32.mrb[0].mxu0
      %v1970 = vadd.f32 0.0, %v1969
      %1971 = vdwg.mxu0
      %s1972 = scalar_lea.vmem %s2, 24
      %v1973 = vld [vmem:[%s1972] sm:$0xff]
      %1975 = vset.pattern.permute.xlu0 0
      %1976 = vperm.xlu0 %1975, %v1973
      %v1977 = vpop.permute.xlu0 %1976
      %v1979 = vmul.f32 %v1968, %v1977
      %v1980 = vmul.f32 %v1970, %v1977
      %1981 = vset.pattern.permute.xlu0 1
      %1982 = vperm.xlu0 %1981, %v1973
      %v1983 = vpop.permute.xlu0 %1982
      %v1985 = vadd.f32 %v1979, %v1983
      %v1986 = vadd.f32 %v1980, %v1983
      %v1987 = vmax.f32 %v1985, 0.0
      %v1988 = vmax.f32 %v1986, 0.0
      %1989 = vst [vmem:[%s197] sm:$0xff] %v1987
      %1990 = vst [vmem:[%s197 + $0x8] sm:$0xff] %v1988
      %p1991 = scmp.lt.s32.totalorder %s15, 1
      %s1992 = scalar_select %p1991, %s15, 1
      %s1993 = smul.addr %s1992, 2
      %s1994 = smul.addr %s1993, 8
      %s1995 = scalar_lea.vmem %s4, %s1994
      // Predicated region
      $region37: #{conv_hole_forward.1} parent=35 // pred_check
        %p1996 = pneg %p122
      $region38: #{conv_hole_forward.1} parent=35 // pred_check_branch
        %1998 = sbr.rel (%p1996) target = $region40
      $region39: #{conv_hole_forward.1} parent=35 // pred_region
        _
      $region40: #{conv_hole_forward.1} parent=35 // pred_fallthru
        _
    $region36: #{conv_hole_forward.1} parent=5 // pred_fallthru
      _
    %p1999 = scmp.le.s32.totalorder 2, %s10
    // Predicated region
    $region41: #{conv_hole_forward.1} parent=5 // pred_check
      %p2000 = pneg %p1999
    $region42: #{conv_hole_forward.1} parent=5 // pred_check_branch
      %2002 = sbr.rel (%p2000) target = $region44
    $region43: #{conv_hole_forward.1} parent=5 // pred_region
      %s2003 = ssub.s32 %s10, 2
      // Predicated region
      $region45: #{conv_hole_forward.1} parent=43 // pred_check
        %p2004 = pneg %p128
      $region46: #{conv_hole_forward.1} parent=43 // pred_check_branch
        %2006 = sbr.rel (%p2004) target = $region48
      $region47: #{conv_hole_forward.1} parent=43 // pred_region
        %p2007 = scmp.lt.s32.totalorder %s16, 1
        %s2008 = scalar_select %p2007, %s16, 1
        %s2009 = smul.addr %s2008, 2
        %s2010 = smul.addr %s2009, 8
        %s2011 = scalar_lea.vmem %s4, %s2010
      $region48: #{conv_hole_forward.1} parent=43 // pred_fallthru
        _
    $region44: #{conv_hole_forward.1} parent=5 // pred_fallthru
      _
  $region6: #{conv_hole_forward.1} parent=0 // loop_footer
    %s14 = sadd.s32 1, %s10
  $region7: #{conv_hole_forward.1} parent=0 // loop_footer_branch
    %9 = sbr.rel target = $region3
  $region8: #{conv_hole_forward.1} parent=0 // loop_exit
    _

</llo_original>
